<compile_context>
chip_gen: v7x
topology: tpu7x:2x2x1
jax: 0.10.0
libtpu: 0.0.40
codegen_flags: <defaults>
</compile_context>

<pallas_src>
import jax
import jax.numpy as jnp
from jax import lax
from jax.experimental import pallas as pl
from jax.experimental.pallas import tpu as pltpu


def _vae_encoder_kernel(tok_ref, emb_ref, wih_ref, whh_ref, bih_ref, bhh_ref,
                        whead_ref, bhead_ref,
                        xemb_ref, h_all_ref, hidden_ref, mu_ref, lv_ref):
    """Embedding + hoisted input projection + unrolled GRU + fused heads."""
    T, B, H = h_all_ref.shape
    V, E = emb_ref.shape
    L = mu_ref.shape[-1]
    TB = T * B

    # ---- Embedding gather as a one-hot matmul on the MXU. -------------------
    tok = tok_ref[...]                                     # (T*B, 1) int32, time-major
    onehot = (tok == lax.broadcasted_iota(jnp.int32, (TB, V), 1)).astype(jnp.float32)
    x_tm = jnp.dot(onehot, emb_ref[...],
                   preferred_element_type=jnp.float32)     # (T*B, E)

    # ---- Hoisted input projection (only W_hh is truly sequential). ----------
    gi_all = (jnp.dot(x_tm, wih_ref[...],
                      preferred_element_type=jnp.float32)
              + bih_ref[...])                              # (T*B, 3H)

    w_hh = whh_ref[...]                                    # (H, 3H)
    b_hh = bhh_ref[...]                                    # (1, 3H)

    # ---- Recurrence: T is small & static, fully unrolled at trace time. -----
    h = jnp.zeros((B, H), jnp.float32)
    for t in range(T):
        x_t = x_tm[t * B:(t + 1) * B, :]                   # (B, E) static slice
        xemb_ref[t] = x_t.astype(xemb_ref.dtype)

        gi = gi_all[t * B:(t + 1) * B, :]                  # (B, 3H)
        gh = jnp.dot(h, w_hh, preferred_element_type=jnp.float32) + b_hh

        i_r, i_z, i_n = gi[:, :H], gi[:, H:2 * H], gi[:, 2 * H:]
        h_r, h_z, h_n = gh[:, :H], gh[:, H:2 * H], gh[:, 2 * H:]

        r = jax.nn.sigmoid(i_r + h_r)
        z = jax.nn.sigmoid(i_z + h_z)
        n = jnp.tanh(i_n + r * h_n)
        h = (1.0 - z) * n + z * h

        h_all_ref[t] = h.astype(h_all_ref.dtype)

    # ---- Epilogue: final hidden + fused (mu | log_var) head. ----------------
    hidden_ref[...] = h.astype(hidden_ref.dtype)
    head = (jnp.dot(h, whead_ref[...], preferred_element_type=jnp.float32)
            + bhead_ref[...])                              # (B, 2L)
    mu_ref[...] = head[:, :L].astype(mu_ref.dtype)
    lv_ref[...] = head[:, L:].astype(lv_ref.dtype)


def vae_encoder_forward(x_tokens, params):
    """Mirrors VAEEncoder.forward: returns (mu, log_var, x_emb, hidden, h_complete)."""
    B, T = x_tokens.shape
    V, E = params["embedding"].shape
    H = params["w_hh"].shape[0]
    L = params["w_mu"].shape[1]

    # Time-major token column so the in-kernel one-hot rows line up with the
    # per-step (B, ...) slices of the hoisted projection.
    tok_tm = jnp.transpose(x_tokens, (1, 0)).reshape(T * B, 1).astype(jnp.int32)

    # Fused mu / log_var head.
    w_head = jnp.concatenate([params["w_mu"], params["w_lv"]], axis=1)   # (H, 2L)
    b_head = jnp.concatenate([params["b_mu"], params["b_lv"]], axis=1)   # (1, 2L)

    def full(shape):
        n = len(shape)
        return pl.BlockSpec(shape, lambda i, n=n: (0,) * n)

    x_emb_tm, h_all, hidden, mu, lv = pl.pallas_call(
        _vae_encoder_kernel,
        grid=(1,),
        in_specs=[
            full((T * B, 1)),          # time-major token ids
            full((V, E)),              # embedding table (pad row zeroed)
            full((E, 3 * H)),          # W_ih^T
            full((H, 3 * H)),          # W_hh^T
            full((1, 3 * H)),          # b_ih
            full((1, 3 * H)),          # b_hh
            full((H, 2 * L)),          # [W_mu | W_logvar]^T
            full((1, 2 * L)),          # [b_mu | b_logvar]
        ],
        out_specs=[
            full((T, B, E)),           # x_emb (time-major)
            full((T, B, H)),           # h_complete (time-major)
            full((B, H)),              # final hidden
            full((B, L)),              # mu
            full((B, L)),              # log_var
        ],
        out_shape=[
            jax.ShapeDtypeStruct((T, B, E), jnp.float32),
            jax.ShapeDtypeStruct((T, B, H), jnp.float32),
            jax.ShapeDtypeStruct((B, H), jnp.float32),
            jax.ShapeDtypeStruct((B, L), jnp.float32),
            jax.ShapeDtypeStruct((B, L), jnp.float32),
        ],
        compiler_params=pltpu.CompilerParams(
            dimension_semantics=("arbitrary",)),           # single sequential step
    )(tok_tm, params["embedding"], params["w_ih"], params["w_hh"],
      params["b_ih"], params["b_hh"], w_head, b_head)

    x_emb = jnp.transpose(x_emb_tm, (1, 0, 2))             # (B, T, E)
    h_complete = jnp.transpose(h_all, (1, 0, 2))           # (B, T, H)
    hidden_out = hidden[:, None, :]                        # (B, 1, H) == permute(1,0,2)[:, :1, :]
    mu_out = mu[:, None, :]                                # (B, 1, L)
    lv_out = lv[:, None, :]                                # (B, 1, L)
    return mu_out, lv_out, x_emb, hidden_out, h_complete


def init_params(key, n_vocab, pad_idx, emb_dim, q_dim, latent_dim):
    ks = jax.random.split(key, 9)
    s = 0.1
    emb = s * jax.random.normal(ks[0], (n_vocab, emb_dim), jnp.float32)
    emb = emb.at[pad_idx].set(0.0)                 # nn.Embedding padding_idx row
    return {
        "embedding": emb,
        "w_ih": s * jax.random.normal(ks[1], (emb_dim, 3 * q_dim), jnp.float32),
        "w_hh": s * jax.random.normal(ks[2], (q_dim, 3 * q_dim), jnp.float32),
        "b_ih": s * jax.random.normal(ks[3], (1, 3 * q_dim), jnp.float32),
        "b_hh": s * jax.random.normal(ks[4], (1, 3 * q_dim), jnp.float32),
        "w_mu": s * jax.random.normal(ks[5], (q_dim, latent_dim), jnp.float32),
        "b_mu": s * jax.random.normal(ks[6], (1, latent_dim), jnp.float32),
        "w_lv": s * jax.random.normal(ks[7], (q_dim, latent_dim), jnp.float32),
        "b_lv": s * jax.random.normal(ks[8], (1, latent_dim), jnp.float32),
    }


def _reference_forward(x_tokens, params):
    """Pure-JAX reference (lax.scan GRU) for correctness checking."""
    emb = params["embedding"]
    x_emb = jnp.take(emb, x_tokens, axis=0)        # (B, T, E)
    B = x_emb.shape[0]
    H = params["w_hh"].shape[0]

    def step(h_prev, x_t):
        gi = x_t @ params["w_ih"] + params["b_ih"]
        gh = h_prev @ params["w_hh"] + params["b_hh"]
        i_r, i_z, i_n = gi[:, :H], gi[:, H:2 * H], gi[:, 2 * H:]
        h_r, h_z, h_n = gh[:, :H], gh[:, H:2 * H], gh[:, 2 * H:]
        r = jax.nn.sigmoid(i_r + h_r)
        z = jax.nn.sigmoid(i_z + h_z)
        n = jnp.tanh(i_n + r * h_n)
        h_new = (1.0 - z) * n + z * h_prev
        return h_new, h_new

    h0 = jnp.zeros((B, H), jnp.float32)
    h_last, h_seq = lax.scan(step, h0, jnp.transpose(x_emb, (1, 0, 2)))
    h_complete = jnp.transpose(h_seq, (1, 0, 2))
    hidden = h_last[:, None, :]
    mu = (h_last @ params["w_mu"] + params["b_mu"])[:, None, :]
    lv = (h_last @ params["w_lv"] + params["b_lv"])[:, None, :]
    return mu, lv, x_emb, hidden, h_complete


if __name__ == "__main__":
    n_vocab, pad_idx = 64, 0
    emb_dim, q_dim, latent_dim = 128, 128, 128
    B, T = 2, 8

    params = init_params(jax.random.PRNGKey(42), n_vocab, pad_idx,
                         emb_dim, q_dim, latent_dim)
    x_tokens = jax.random.randint(jax.random.PRNGKey(0), (B, T), 0, n_vocab,
                                  dtype=jnp.int32)

    outs = vae_encoder_forward(x_tokens, params)
    outs = jax.block_until_ready(outs)

    refs = _reference_forward(x_tokens, params)
    for o, r in zip(outs, refs):
        assert o.shape == r.shape, (o.shape, r.shape)
        assert jnp.allclose(o, r, rtol=1e-4, atol=1e-4), "mismatch vs reference"

    mu, log_var, x_emb, hidden, h_complete = outs
    assert mu.shape == (B, 1, latent_dim)
    assert log_var.shape == (B, 1, latent_dim)
    assert x_emb.shape == (B, T, emb_dim)
    assert hidden.shape == (B, 1, q_dim)
    assert h_complete.shape == (B, T, q_dim)

    print("KERNEL_OK")
</pallas_src>

<mosaic_0001>
module attributes {stable_mosaic.version = 11 : i64} {
  func.func @_vae_encoder_kernel(%arg0: i32, %arg1: memref<16x1xi32, #tpu.memory_space<vmem>>, %arg2: memref<64x128xf32, #tpu.memory_space<vmem>>, %arg3: memref<128x384xf32, #tpu.memory_space<vmem>>, %arg4: memref<128x384xf32, #tpu.memory_space<vmem>>, %arg5: memref<1x384xf32, #tpu.memory_space<vmem>>, %arg6: memref<1x384xf32, #tpu.memory_space<vmem>>, %arg7: memref<128x256xf32, #tpu.memory_space<vmem>>, %arg8: memref<1x256xf32, #tpu.memory_space<vmem>>, %arg9: memref<8x2x128xf32, #tpu.memory_space<vmem>>, %arg10: memref<8x2x128xf32, #tpu.memory_space<vmem>>, %arg11: memref<2x128xf32, #tpu.memory_space<vmem>>, %arg12: memref<2x128xf32, #tpu.memory_space<vmem>>, %arg13: memref<2x128xf32, #tpu.memory_space<vmem>>) attributes {dimension_semantics = [#tpu.dimension_semantics<arbitrary>], iteration_bounds = array<i64: 1>, scalar_prefetch = 0 : i64, scratch_operands = 0 : i64, tpu.core_type = #tpu.core_type<tc>, window_params = [{pipeline_mode = #tpu.pipeline_mode<synchronous>, transform_indices = @transform_0, window_bounds = array<i64: 16, 1>}, {pipeline_mode = #tpu.pipeline_mode<synchronous>, transform_indices = @transform_1, window_bounds = array<i64: 64, 128>}, {pipeline_mode = #tpu.pipeline_mode<synchronous>, transform_indices = @transform_2, window_bounds = array<i64: 128, 384>}, {pipeline_mode = #tpu.pipeline_mode<synchronous>, transform_indices = @transform_3, window_bounds = array<i64: 128, 384>}, {pipeline_mode = #tpu.pipeline_mode<synchronous>, transform_indices = @transform_4, window_bounds = array<i64: 1, 384>}, {pipeline_mode = #tpu.pipeline_mode<synchronous>, transform_indices = @transform_5, window_bounds = array<i64: 1, 384>}, {pipeline_mode = #tpu.pipeline_mode<synchronous>, transform_indices = @transform_6, window_bounds = array<i64: 128, 256>}, {pipeline_mode = #tpu.pipeline_mode<synchronous>, transform_indices = @transform_7, window_bounds = array<i64: 1, 256>}, {pipeline_mode = #tpu.pipeline_mode<synchronous>, transform_indices = @transform_8, window_bounds = array<i64: 8, 2, 128>}, {pipeline_mode = #tpu.pipeline_mode<synchronous>, transform_indices = @transform_9, window_bounds = array<i64: 8, 2, 128>}, {pipeline_mode = #tpu.pipeline_mode<synchronous>, transform_indices = @transform_10, window_bounds = array<i64: 2, 128>}, {pipeline_mode = #tpu.pipeline_mode<synchronous>, transform_indices = @transform_11, window_bounds = array<i64: 2, 128>}, {pipeline_mode = #tpu.pipeline_mode<synchronous>, transform_indices = @transform_12, window_bounds = array<i64: 2, 128>}]} {
    %c0 = arith.constant 0 : index
    %c0_0 = arith.constant 0 : index
    %0 = vector.load %arg1[%c0, %c0_0] : memref<16x1xi32, #tpu.memory_space<vmem>>, vector<16x1xi32>
    %1 = tpu.iota {dimensions = array<i32: 1>} : vector<16x64xi32>
    %2 = vector.broadcast %0 : vector<16x1xi32> to vector<16x64xi32>
    %3 = arith.cmpi eq, %2, %1 : vector<16x64xi32>
    %4 = arith.extui %3 : vector<16x64xi1> to vector<16x64xi32>
    %5 = arith.sitofp %4 : vector<16x64xi32> to vector<16x64xf32>
    %c0_1 = arith.constant 0 : index
    %c0_2 = arith.constant 0 : index
    %6 = vector.load %arg2[%c0_1, %c0_2] : memref<64x128xf32, #tpu.memory_space<vmem>>, vector<64x128xf32>
    %cst = arith.constant dense<0.000000e+00> : vector<16x128xf32>
    %7 = tpu.matmul %5, %6, %cst {dimension_numbers = #tpu.dot_dimension_numbers<[1], [0], [0], [1], [0, 0, 1, 1], [], []>} : vector<16x64xf32>, vector<64x128xf32>, vector<16x128xf32> -> vector<16x128xf32>
    %c0_3 = arith.constant 0 : index
    %c0_4 = arith.constant 0 : index
    %8 = vector.load %arg3[%c0_3, %c0_4] : memref<128x384xf32, #tpu.memory_space<vmem>>, vector<128x384xf32>
    %cst_5 = arith.constant dense<0.000000e+00> : vector<16x384xf32>
    %9 = tpu.matmul %7, %8, %cst_5 {dimension_numbers = #tpu.dot_dimension_numbers<[1], [0], [0], [1], [0, 0, 1, 1], [], []>} : vector<16x128xf32>, vector<128x384xf32>, vector<16x384xf32> -> vector<16x384xf32>
    %c0_6 = arith.constant 0 : index
    %c0_7 = arith.constant 0 : index
    %10 = vector.load %arg5[%c0_6, %c0_7] : memref<1x384xf32, #tpu.memory_space<vmem>>, vector<1x384xf32>
    %11 = vector.broadcast %10 : vector<1x384xf32> to vector<16x384xf32>
    %12 = arith.addf %9, %11 : vector<16x384xf32>
    %c0_8 = arith.constant 0 : index
    %c0_9 = arith.constant 0 : index
    %13 = vector.load %arg4[%c0_8, %c0_9] : memref<128x384xf32, #tpu.memory_space<vmem>>, vector<128x384xf32>
    %c0_10 = arith.constant 0 : index
    %c0_11 = arith.constant 0 : index
    %14 = vector.load %arg6[%c0_10, %c0_11] : memref<1x384xf32, #tpu.memory_space<vmem>>, vector<1x384xf32>
    %cst_12 = arith.constant 0.000000e+00 : f32
    %15 = vector.broadcast %cst_12 : f32 to vector<2x128xf32>
    %16 = vector.extract_strided_slice %7 {offsets = [0, 0], sizes = [2, 128], strides = [1, 1]} : vector<16x128xf32> to vector<2x128xf32>
    %c0_13 = arith.constant 0 : index
    %c0_14 = arith.constant 0 : index
    %c0_15 = arith.constant 0 : index
    %17 = vector.load %arg9[%c0_13, %c0_14, %c0_15] : memref<8x2x128xf32, #tpu.memory_space<vmem>>, vector<1x2x128xf32>
    %18 = vector.shape_cast %17 : vector<1x2x128xf32> to vector<2x128xf32>
    %19 = vector.shape_cast %16 : vector<2x128xf32> to vector<1x2x128xf32>
    tpu.vector_store %arg9[%c0_13, %c0_14, %c0_15], %19 {strides = array<i32>} : memref<8x2x128xf32, #tpu.memory_space<vmem>>, vector<1x2x128xf32>,
    %20 = vector.extract_strided_slice %12 {offsets = [0, 0], sizes = [2, 384], strides = [1, 1]} : vector<16x384xf32> to vector<2x384xf32>
    %cst_16 = arith.constant dense<0.000000e+00> : vector<2x384xf32>
    %21 = tpu.matmul %15, %13, %cst_16 {dimension_numbers = #tpu.dot_dimension_numbers<[1], [0], [0], [1], [0, 0, 1, 1], [], []>} : vector<2x128xf32>, vector<128x384xf32>, vector<2x384xf32> -> vector<2x384xf32>
    %22 = vector.broadcast %14 : vector<1x384xf32> to vector<2x384xf32>
    %23 = arith.addf %21, %22 : vector<2x384xf32>
    %24 = vector.extract_strided_slice %20 {offsets = [0, 0], sizes = [2, 128], strides = [1, 1]} : vector<2x384xf32> to vector<2x128xf32>
    %25 = vector.extract_strided_slice %20 {offsets = [0, 128], sizes = [2, 128], strides = [1, 1]} : vector<2x384xf32> to vector<2x128xf32>
    %26 = vector.extract_strided_slice %20 {offsets = [0, 256], sizes = [2, 128], strides = [1, 1]} : vector<2x384xf32> to vector<2x128xf32>
    %27 = vector.extract_strided_slice %23 {offsets = [0, 0], sizes = [2, 128], strides = [1, 1]} : vector<2x384xf32> to vector<2x128xf32>
    %28 = vector.extract_strided_slice %23 {offsets = [0, 128], sizes = [2, 128], strides = [1, 1]} : vector<2x384xf32> to vector<2x128xf32>
    %29 = vector.extract_strided_slice %23 {offsets = [0, 256], sizes = [2, 128], strides = [1, 1]} : vector<2x384xf32> to vector<2x128xf32>
    %30 = arith.addf %24, %27 : vector<2x128xf32>
    %31 = arith.negf %30 : vector<2x128xf32>
    %32 = math.exp %31 : vector<2x128xf32>
    %cst_17 = arith.constant 1.000000e+00 : f32
    %33 = vector.broadcast %cst_17 : f32 to vector<2x128xf32>
    %34 = arith.addf %33, %32 : vector<2x128xf32>
    %35 = arith.divf %33, %34 : vector<2x128xf32>
    %36 = arith.addf %25, %28 : vector<2x128xf32>
    %37 = arith.negf %36 : vector<2x128xf32>
    %38 = math.exp %37 : vector<2x128xf32>
    %cst_18 = arith.constant 1.000000e+00 : f32
    %39 = vector.broadcast %cst_18 : f32 to vector<2x128xf32>
    %40 = arith.addf %39, %38 : vector<2x128xf32>
    %41 = arith.divf %39, %40 : vector<2x128xf32>
    %42 = arith.mulf %35, %29 : vector<2x128xf32>
    %43 = arith.addf %26, %42 : vector<2x128xf32>
    %44 = math.tanh %43 : vector<2x128xf32>
    %cst_19 = arith.constant 1.000000e+00 : f32
    %45 = vector.broadcast %cst_19 : f32 to vector<2x128xf32>
    %46 = arith.subf %45, %41 : vector<2x128xf32>
    %47 = arith.mulf %46, %44 : vector<2x128xf32>
    %48 = arith.mulf %41, %15 : vector<2x128xf32>
    %49 = arith.addf %47, %48 : vector<2x128xf32>
    %c0_20 = arith.constant 0 : index
    %c0_21 = arith.constant 0 : index
    %c0_22 = arith.constant 0 : index
    %50 = vector.load %arg10[%c0_20, %c0_21, %c0_22] : memref<8x2x128xf32, #tpu.memory_space<vmem>>, vector<1x2x128xf32>
    %51 = vector.shape_cast %50 : vector<1x2x128xf32> to vector<2x128xf32>
    %52 = vector.shape_cast %49 : vector<2x128xf32> to vector<1x2x128xf32>
    tpu.vector_store %arg10[%c0_20, %c0_21, %c0_22], %52 {strides = array<i32>} : memref<8x2x128xf32, #tpu.memory_space<vmem>>, vector<1x2x128xf32>,
    %53 = vector.extract_strided_slice %7 {offsets = [2, 0], sizes = [2, 128], strides = [1, 1]} : vector<16x128xf32> to vector<2x128xf32>
    %c1 = arith.constant 1 : index
    %c0_23 = arith.constant 0 : index
    %c0_24 = arith.constant 0 : index
    %54 = vector.load %arg9[%c1, %c0_23, %c0_24] : memref<8x2x128xf32, #tpu.memory_space<vmem>>, vector<1x2x128xf32>
    %55 = vector.shape_cast %54 : vector<1x2x128xf32> to vector<2x128xf32>
    %56 = vector.shape_cast %53 : vector<2x128xf32> to vector<1x2x128xf32>
    tpu.vector_store %arg9[%c1, %c0_23, %c0_24], %56 {strides = array<i32>} : memref<8x2x128xf32, #tpu.memory_space<vmem>>, vector<1x2x128xf32>,
    %57 = vector.extract_strided_slice %12 {offsets = [2, 0], sizes = [2, 384], strides = [1, 1]} : vector<16x384xf32> to vector<2x384xf32>
    %cst_25 = arith.constant dense<0.000000e+00> : vector<2x384xf32>
    %58 = tpu.matmul %49, %13, %cst_25 {dimension_numbers = #tpu.dot_dimension_numbers<[1], [0], [0], [1], [0, 0, 1, 1], [], []>} : vector<2x128xf32>, vector<128x384xf32>, vector<2x384xf32> -> vector<2x384xf32>
    %59 = vector.broadcast %14 : vector<1x384xf32> to vector<2x384xf32>
    %60 = arith.addf %58, %59 : vector<2x384xf32>
    %61 = vector.extract_strided_slice %57 {offsets = [0, 0], sizes = [2, 128], strides = [1, 1]} : vector<2x384xf32> to vector<2x128xf32>
    %62 = vector.extract_strided_slice %57 {offsets = [0, 128], sizes = [2, 128], strides = [1, 1]} : vector<2x384xf32> to vector<2x128xf32>
    %63 = vector.extract_strided_slice %57 {offsets = [0, 256], sizes = [2, 128], strides = [1, 1]} : vector<2x384xf32> to vector<2x128xf32>
    %64 = vector.extract_strided_slice %60 {offsets = [0, 0], sizes = [2, 128], strides = [1, 1]} : vector<2x384xf32> to vector<2x128xf32>
    %65 = vector.extract_strided_slice %60 {offsets = [0, 128], sizes = [2, 128], strides = [1, 1]} : vector<2x384xf32> to vector<2x128xf32>
    %66 = vector.extract_strided_slice %60 {offsets = [0, 256], sizes = [2, 128], strides = [1, 1]} : vector<2x384xf32> to vector<2x128xf32>
    %67 = arith.addf %61, %64 : vector<2x128xf32>
    %68 = arith.negf %67 : vector<2x128xf32>
    %69 = math.exp %68 : vector<2x128xf32>
    %cst_26 = arith.constant 1.000000e+00 : f32
    %70 = vector.broadcast %cst_26 : f32 to vector<2x128xf32>
    %71 = arith.addf %70, %69 : vector<2x128xf32>
    %72 = arith.divf %70, %71 : vector<2x128xf32>
    %73 = arith.addf %62, %65 : vector<2x128xf32>
    %74 = arith.negf %73 : vector<2x128xf32>
    %75 = math.exp %74 : vector<2x128xf32>
    %cst_27 = arith.constant 1.000000e+00 : f32
    %76 = vector.broadcast %cst_27 : f32 to vector<2x128xf32>
    %77 = arith.addf %76, %75 : vector<2x128xf32>
    %78 = arith.divf %76, %77 : vector<2x128xf32>
    %79 = arith.mulf %72, %66 : vector<2x128xf32>
    %80 = arith.addf %63, %79 : vector<2x128xf32>
    %81 = math.tanh %80 : vector<2x128xf32>
    %cst_28 = arith.constant 1.000000e+00 : f32
    %82 = vector.broadcast %cst_28 : f32 to vector<2x128xf32>
    %83 = arith.subf %82, %78 : vector<2x128xf32>
    %84 = arith.mulf %83, %81 : vector<2x128xf32>
    %85 = arith.mulf %78, %49 : vector<2x128xf32>
    %86 = arith.addf %84, %85 : vector<2x128xf32>
    %c1_29 = arith.constant 1 : index
    %c0_30 = arith.constant 0 : index
    %c0_31 = arith.constant 0 : index
    %87 = vector.load %arg10[%c1_29, %c0_30, %c0_31] : memref<8x2x128xf32, #tpu.memory_space<vmem>>, vector<1x2x128xf32>
    %88 = vector.shape_cast %87 : vector<1x2x128xf32> to vector<2x128xf32>
    %89 = vector.shape_cast %86 : vector<2x128xf32> to vector<1x2x128xf32>
    tpu.vector_store %arg10[%c1_29, %c0_30, %c0_31], %89 {strides = array<i32>} : memref<8x2x128xf32, #tpu.memory_space<vmem>>, vector<1x2x128xf32>,
    %90 = vector.extract_strided_slice %7 {offsets = [4, 0], sizes = [2, 128], strides = [1, 1]} : vector<16x128xf32> to vector<2x128xf32>
    %c2 = arith.constant 2 : index
    %c0_32 = arith.constant 0 : index
    %c0_33 = arith.constant 0 : index
    %91 = vector.load %arg9[%c2, %c0_32, %c0_33] : memref<8x2x128xf32, #tpu.memory_space<vmem>>, vector<1x2x128xf32>
    %92 = vector.shape_cast %91 : vector<1x2x128xf32> to vector<2x128xf32>
    %93 = vector.shape_cast %90 : vector<2x128xf32> to vector<1x2x128xf32>
    tpu.vector_store %arg9[%c2, %c0_32, %c0_33], %93 {strides = array<i32>} : memref<8x2x128xf32, #tpu.memory_space<vmem>>, vector<1x2x128xf32>,
    %94 = vector.extract_strided_slice %12 {offsets = [4, 0], sizes = [2, 384], strides = [1, 1]} : vector<16x384xf32> to vector<2x384xf32>
    %cst_34 = arith.constant dense<0.000000e+00> : vector<2x384xf32>
    %95 = tpu.matmul %86, %13, %cst_34 {dimension_numbers = #tpu.dot_dimension_numbers<[1], [0], [0], [1], [0, 0, 1, 1], [], []>} : vector<2x128xf32>, vector<128x384xf32>, vector<2x384xf32> -> vector<2x384xf32>
    %96 = vector.broadcast %14 : vector<1x384xf32> to vector<2x384xf32>
    %97 = arith.addf %95, %96 : vector<2x384xf32>
    %98 = vector.extract_strided_slice %94 {offsets = [0, 0], sizes = [2, 128], strides = [1, 1]} : vector<2x384xf32> to vector<2x128xf32>
    %99 = vector.extract_strided_slice %94 {offsets = [0, 128], sizes = [2, 128], strides = [1, 1]} : vector<2x384xf32> to vector<2x128xf32>
    %100 = vector.extract_strided_slice %94 {offsets = [0, 256], sizes = [2, 128], strides = [1, 1]} : vector<2x384xf32> to vector<2x128xf32>
    %101 = vector.extract_strided_slice %97 {offsets = [0, 0], sizes = [2, 128], strides = [1, 1]} : vector<2x384xf32> to vector<2x128xf32>
    %102 = vector.extract_strided_slice %97 {offsets = [0, 128], sizes = [2, 128], strides = [1, 1]} : vector<2x384xf32> to vector<2x128xf32>
    %103 = vector.extract_strided_slice %97 {offsets = [0, 256], sizes = [2, 128], strides = [1, 1]} : vector<2x384xf32> to vector<2x128xf32>
    %104 = arith.addf %98, %101 : vector<2x128xf32>
    %105 = arith.negf %104 : vector<2x128xf32>
    %106 = math.exp %105 : vector<2x128xf32>
    %cst_35 = arith.constant 1.000000e+00 : f32
    %107 = vector.broadcast %cst_35 : f32 to vector<2x128xf32>
    %108 = arith.addf %107, %106 : vector<2x128xf32>
    %109 = arith.divf %107, %108 : vector<2x128xf32>
    %110 = arith.addf %99, %102 : vector<2x128xf32>
    %111 = arith.negf %110 : vector<2x128xf32>
    %112 = math.exp %111 : vector<2x128xf32>
    %cst_36 = arith.constant 1.000000e+00 : f32
    %113 = vector.broadcast %cst_36 : f32 to vector<2x128xf32>
    %114 = arith.addf %113, %112 : vector<2x128xf32>
    %115 = arith.divf %113, %114 : vector<2x128xf32>
    %116 = arith.mulf %109, %103 : vector<2x128xf32>
    %117 = arith.addf %100, %116 : vector<2x128xf32>
    %118 = math.tanh %117 : vector<2x128xf32>
    %cst_37 = arith.constant 1.000000e+00 : f32
    %119 = vector.broadcast %cst_37 : f32 to vector<2x128xf32>
    %120 = arith.subf %119, %115 : vector<2x128xf32>
    %121 = arith.mulf %120, %118 : vector<2x128xf32>
    %122 = arith.mulf %115, %86 : vector<2x128xf32>
    %123 = arith.addf %121, %122 : vector<2x128xf32>
    %c2_38 = arith.constant 2 : index
    %c0_39 = arith.constant 0 : index
    %c0_40 = arith.constant 0 : index
    %124 = vector.load %arg10[%c2_38, %c0_39, %c0_40] : memref<8x2x128xf32, #tpu.memory_space<vmem>>, vector<1x2x128xf32>
    %125 = vector.shape_cast %124 : vector<1x2x128xf32> to vector<2x128xf32>
    %126 = vector.shape_cast %123 : vector<2x128xf32> to vector<1x2x128xf32>
    tpu.vector_store %arg10[%c2_38, %c0_39, %c0_40], %126 {strides = array<i32>} : memref<8x2x128xf32, #tpu.memory_space<vmem>>, vector<1x2x128xf32>,
    %127 = vector.extract_strided_slice %7 {offsets = [6, 0], sizes = [2, 128], strides = [1, 1]} : vector<16x128xf32> to vector<2x128xf32>
    %c3 = arith.constant 3 : index
    %c0_41 = arith.constant 0 : index
    %c0_42 = arith.constant 0 : index
    %128 = vector.load %arg9[%c3, %c0_41, %c0_42] : memref<8x2x128xf32, #tpu.memory_space<vmem>>, vector<1x2x128xf32>
    %129 = vector.shape_cast %128 : vector<1x2x128xf32> to vector<2x128xf32>
    %130 = vector.shape_cast %127 : vector<2x128xf32> to vector<1x2x128xf32>
    tpu.vector_store %arg9[%c3, %c0_41, %c0_42], %130 {strides = array<i32>} : memref<8x2x128xf32, #tpu.memory_space<vmem>>, vector<1x2x128xf32>,
    %131 = vector.extract_strided_slice %12 {offsets = [6, 0], sizes = [2, 384], strides = [1, 1]} : vector<16x384xf32> to vector<2x384xf32>
    %cst_43 = arith.constant dense<0.000000e+00> : vector<2x384xf32>
    %132 = tpu.matmul %123, %13, %cst_43 {dimension_numbers = #tpu.dot_dimension_numbers<[1], [0], [0], [1], [0, 0, 1, 1], [], []>} : vector<2x128xf32>, vector<128x384xf32>, vector<2x384xf32> -> vector<2x384xf32>
    %133 = vector.broadcast %14 : vector<1x384xf32> to vector<2x384xf32>
    %134 = arith.addf %132, %133 : vector<2x384xf32>
    %135 = vector.extract_strided_slice %131 {offsets = [0, 0], sizes = [2, 128], strides = [1, 1]} : vector<2x384xf32> to vector<2x128xf32>
    %136 = vector.extract_strided_slice %131 {offsets = [0, 128], sizes = [2, 128], strides = [1, 1]} : vector<2x384xf32> to vector<2x128xf32>
    %137 = vector.extract_strided_slice %131 {offsets = [0, 256], sizes = [2, 128], strides = [1, 1]} : vector<2x384xf32> to vector<2x128xf32>
    %138 = vector.extract_strided_slice %134 {offsets = [0, 0], sizes = [2, 128], strides = [1, 1]} : vector<2x384xf32> to vector<2x128xf32>
    %139 = vector.extract_strided_slice %134 {offsets = [0, 128], sizes = [2, 128], strides = [1, 1]} : vector<2x384xf32> to vector<2x128xf32>
    %140 = vector.extract_strided_slice %134 {offsets = [0, 256], sizes = [2, 128], strides = [1, 1]} : vector<2x384xf32> to vector<2x128xf32>
    %141 = arith.addf %135, %138 : vector<2x128xf32>
    %142 = arith.negf %141 : vector<2x128xf32>
    %143 = math.exp %142 : vector<2x128xf32>
    %cst_44 = arith.constant 1.000000e+00 : f32
    %144 = vector.broadcast %cst_44 : f32 to vector<2x128xf32>
    %145 = arith.addf %144, %143 : vector<2x128xf32>
    %146 = arith.divf %144, %145 : vector<2x128xf32>
    %147 = arith.addf %136, %139 : vector<2x128xf32>
    %148 = arith.negf %147 : vector<2x128xf32>
    %149 = math.exp %148 : vector<2x128xf32>
    %cst_45 = arith.constant 1.000000e+00 : f32
    %150 = vector.broadcast %cst_45 : f32 to vector<2x128xf32>
    %151 = arith.addf %150, %149 : vector<2x128xf32>
    %152 = arith.divf %150, %151 : vector<2x128xf32>
    %153 = arith.mulf %146, %140 : vector<2x128xf32>
    %154 = arith.addf %137, %153 : vector<2x128xf32>
    %155 = math.tanh %154 : vector<2x128xf32>
    %cst_46 = arith.constant 1.000000e+00 : f32
    %156 = vector.broadcast %cst_46 : f32 to vector<2x128xf32>
    %157 = arith.subf %156, %152 : vector<2x128xf32>
    %158 = arith.mulf %157, %155 : vector<2x128xf32>
    %159 = arith.mulf %152, %123 : vector<2x128xf32>
    %160 = arith.addf %158, %159 : vector<2x128xf32>
    %c3_47 = arith.constant 3 : index
    %c0_48 = arith.constant 0 : index
    %c0_49 = arith.constant 0 : index
    %161 = vector.load %arg10[%c3_47, %c0_48, %c0_49] : memref<8x2x128xf32, #tpu.memory_space<vmem>>, vector<1x2x128xf32>
    %162 = vector.shape_cast %161 : vector<1x2x128xf32> to vector<2x128xf32>
    %163 = vector.shape_cast %160 : vector<2x128xf32> to vector<1x2x128xf32>
    tpu.vector_store %arg10[%c3_47, %c0_48, %c0_49], %163 {strides = array<i32>} : memref<8x2x128xf32, #tpu.memory_space<vmem>>, vector<1x2x128xf32>,
    %164 = vector.extract_strided_slice %7 {offsets = [8, 0], sizes = [2, 128], strides = [1, 1]} : vector<16x128xf32> to vector<2x128xf32>
    %c4 = arith.constant 4 : index
    %c0_50 = arith.constant 0 : index
    %c0_51 = arith.constant 0 : index
    %165 = vector.load %arg9[%c4, %c0_50, %c0_51] : memref<8x2x128xf32, #tpu.memory_space<vmem>>, vector<1x2x128xf32>
    %166 = vector.shape_cast %165 : vector<1x2x128xf32> to vector<2x128xf32>
    %167 = vector.shape_cast %164 : vector<2x128xf32> to vector<1x2x128xf32>
    tpu.vector_store %arg9[%c4, %c0_50, %c0_51], %167 {strides = array<i32>} : memref<8x2x128xf32, #tpu.memory_space<vmem>>, vector<1x2x128xf32>,
    %168 = vector.extract_strided_slice %12 {offsets = [8, 0], sizes = [2, 384], strides = [1, 1]} : vector<16x384xf32> to vector<2x384xf32>
    %cst_52 = arith.constant dense<0.000000e+00> : vector<2x384xf32>
    %169 = tpu.matmul %160, %13, %cst_52 {dimension_numbers = #tpu.dot_dimension_numbers<[1], [0], [0], [1], [0, 0, 1, 1], [], []>} : vector<2x128xf32>, vector<128x384xf32>, vector<2x384xf32> -> vector<2x384xf32>
    %170 = vector.broadcast %14 : vector<1x384xf32> to vector<2x384xf32>
    %171 = arith.addf %169, %170 : vector<2x384xf32>
    %172 = vector.extract_strided_slice %168 {offsets = [0, 0], sizes = [2, 128], strides = [1, 1]} : vector<2x384xf32> to vector<2x128xf32>
    %173 = vector.extract_strided_slice %168 {offsets = [0, 128], sizes = [2, 128], strides = [1, 1]} : vector<2x384xf32> to vector<2x128xf32>
    %174 = vector.extract_strided_slice %168 {offsets = [0, 256], sizes = [2, 128], strides = [1, 1]} : vector<2x384xf32> to vector<2x128xf32>
    %175 = vector.extract_strided_slice %171 {offsets = [0, 0], sizes = [2, 128], strides = [1, 1]} : vector<2x384xf32> to vector<2x128xf32>
    %176 = vector.extract_strided_slice %171 {offsets = [0, 128], sizes = [2, 128], strides = [1, 1]} : vector<2x384xf32> to vector<2x128xf32>
    %177 = vector.extract_strided_slice %171 {offsets = [0, 256], sizes = [2, 128], strides = [1, 1]} : vector<2x384xf32> to vector<2x128xf32>
    %178 = arith.addf %172, %175 : vector<2x128xf32>
    %179 = arith.negf %178 : vector<2x128xf32>
    %180 = math.exp %179 : vector<2x128xf32>
    %cst_53 = arith.constant 1.000000e+00 : f32
    %181 = vector.broadcast %cst_53 : f32 to vector<2x128xf32>
    %182 = arith.addf %181, %180 : vector<2x128xf32>
    %183 = arith.divf %181, %182 : vector<2x128xf32>
    %184 = arith.addf %173, %176 : vector<2x128xf32>
    %185 = arith.negf %184 : vector<2x128xf32>
    %186 = math.exp %185 : vector<2x128xf32>
    %cst_54 = arith.constant 1.000000e+00 : f32
    %187 = vector.broadcast %cst_54 : f32 to vector<2x128xf32>
    %188 = arith.addf %187, %186 : vector<2x128xf32>
    %189 = arith.divf %187, %188 : vector<2x128xf32>
    %190 = arith.mulf %183, %177 : vector<2x128xf32>
    %191 = arith.addf %174, %190 : vector<2x128xf32>
    %192 = math.tanh %191 : vector<2x128xf32>
    %cst_55 = arith.constant 1.000000e+00 : f32
    %193 = vector.broadcast %cst_55 : f32 to vector<2x128xf32>
    %194 = arith.subf %193, %189 : vector<2x128xf32>
    %195 = arith.mulf %194, %192 : vector<2x128xf32>
    %196 = arith.mulf %189, %160 : vector<2x128xf32>
    %197 = arith.addf %195, %196 : vector<2x128xf32>
    %c4_56 = arith.constant 4 : index
    %c0_57 = arith.constant 0 : index
    %c0_58 = arith.constant 0 : index
    %198 = vector.load %arg10[%c4_56, %c0_57, %c0_58] : memref<8x2x128xf32, #tpu.memory_space<vmem>>, vector<1x2x128xf32>
    %199 = vector.shape_cast %198 : vector<1x2x128xf32> to vector<2x128xf32>
    %200 = vector.shape_cast %197 : vector<2x128xf32> to vector<1x2x128xf32>
    tpu.vector_store %arg10[%c4_56, %c0_57, %c0_58], %200 {strides = array<i32>} : memref<8x2x128xf32, #tpu.memory_space<vmem>>, vector<1x2x128xf32>,
    %201 = vector.extract_strided_slice %7 {offsets = [10, 0], sizes = [2, 128], strides = [1, 1]} : vector<16x128xf32> to vector<2x128xf32>
    %c5 = arith.constant 5 : index
    %c0_59 = arith.constant 0 : index
    %c0_60 = arith.constant 0 : index
    %202 = vector.load %arg9[%c5, %c0_59, %c0_60] : memref<8x2x128xf32, #tpu.memory_space<vmem>>, vector<1x2x128xf32>
    %203 = vector.shape_cast %202 : vector<1x2x128xf32> to vector<2x128xf32>
    %204 = vector.shape_cast %201 : vector<2x128xf32> to vector<1x2x128xf32>
    tpu.vector_store %arg9[%c5, %c0_59, %c0_60], %204 {strides = array<i32>} : memref<8x2x128xf32, #tpu.memory_space<vmem>>, vector<1x2x128xf32>,
    %205 = vector.extract_strided_slice %12 {offsets = [10, 0], sizes = [2, 384], strides = [1, 1]} : vector<16x384xf32> to vector<2x384xf32>
    %cst_61 = arith.constant dense<0.000000e+00> : vector<2x384xf32>
    %206 = tpu.matmul %197, %13, %cst_61 {dimension_numbers = #tpu.dot_dimension_numbers<[1], [0], [0], [1], [0, 0, 1, 1], [], []>} : vector<2x128xf32>, vector<128x384xf32>, vector<2x384xf32> -> vector<2x384xf32>
    %207 = vector.broadcast %14 : vector<1x384xf32> to vector<2x384xf32>
    %208 = arith.addf %206, %207 : vector<2x384xf32>
    %209 = vector.extract_strided_slice %205 {offsets = [0, 0], sizes = [2, 128], strides = [1, 1]} : vector<2x384xf32> to vector<2x128xf32>
    %210 = vector.extract_strided_slice %205 {offsets = [0, 128], sizes = [2, 128], strides = [1, 1]} : vector<2x384xf32> to vector<2x128xf32>
    %211 = vector.extract_strided_slice %205 {offsets = [0, 256], sizes = [2, 128], strides = [1, 1]} : vector<2x384xf32> to vector<2x128xf32>
    %212 = vector.extract_strided_slice %208 {offsets = [0, 0], sizes = [2, 128], strides = [1, 1]} : vector<2x384xf32> to vector<2x128xf32>
    %213 = vector.extract_strided_slice %208 {offsets = [0, 128], sizes = [2, 128], strides = [1, 1]} : vector<2x384xf32> to vector<2x128xf32>
    %214 = vector.extract_strided_slice %208 {offsets = [0, 256], sizes = [2, 128], strides = [1, 1]} : vector<2x384xf32> to vector<2x128xf32>
    %215 = arith.addf %209, %212 : vector<2x128xf32>
    %216 = arith.negf %215 : vector<2x128xf32>
    %217 = math.exp %216 : vector<2x128xf32>
    %cst_62 = arith.constant 1.000000e+00 : f32
    %218 = vector.broadcast %cst_62 : f32 to vector<2x128xf32>
    %219 = arith.addf %218, %217 : vector<2x128xf32>
    %220 = arith.divf %218, %219 : vector<2x128xf32>
    %221 = arith.addf %210, %213 : vector<2x128xf32>
    %222 = arith.negf %221 : vector<2x128xf32>
    %223 = math.exp %222 : vector<2x128xf32>
    %cst_63 = arith.constant 1.000000e+00 : f32
    %224 = vector.broadcast %cst_63 : f32 to vector<2x128xf32>
    %225 = arith.addf %224, %223 : vector<2x128xf32>
    %226 = arith.divf %224, %225 : vector<2x128xf32>
    %227 = arith.mulf %220, %214 : vector<2x128xf32>
    %228 = arith.addf %211, %227 : vector<2x128xf32>
    %229 = math.tanh %228 : vector<2x128xf32>
    %cst_64 = arith.constant 1.000000e+00 : f32
    %230 = vector.broadcast %cst_64 : f32 to vector<2x128xf32>
    %231 = arith.subf %230, %226 : vector<2x128xf32>
    %232 = arith.mulf %231, %229 : vector<2x128xf32>
    %233 = arith.mulf %226, %197 : vector<2x128xf32>
    %234 = arith.addf %232, %233 : vector<2x128xf32>
    %c5_65 = arith.constant 5 : index
    %c0_66 = arith.constant 0 : index
    %c0_67 = arith.constant 0 : index
    %235 = vector.load %arg10[%c5_65, %c0_66, %c0_67] : memref<8x2x128xf32, #tpu.memory_space<vmem>>, vector<1x2x128xf32>
    %236 = vector.shape_cast %235 : vector<1x2x128xf32> to vector<2x128xf32>
    %237 = vector.shape_cast %234 : vector<2x128xf32> to vector<1x2x128xf32>
    tpu.vector_store %arg10[%c5_65, %c0_66, %c0_67], %237 {strides = array<i32>} : memref<8x2x128xf32, #tpu.memory_space<vmem>>, vector<1x2x128xf32>,
    %238 = vector.extract_strided_slice %7 {offsets = [12, 0], sizes = [2, 128], strides = [1, 1]} : vector<16x128xf32> to vector<2x128xf32>
    %c6 = arith.constant 6 : index
    %c0_68 = arith.constant 0 : index
    %c0_69 = arith.constant 0 : index
    %239 = vector.load %arg9[%c6, %c0_68, %c0_69] : memref<8x2x128xf32, #tpu.memory_space<vmem>>, vector<1x2x128xf32>
    %240 = vector.shape_cast %239 : vector<1x2x128xf32> to vector<2x128xf32>
    %241 = vector.shape_cast %238 : vector<2x128xf32> to vector<1x2x128xf32>
    tpu.vector_store %arg9[%c6, %c0_68, %c0_69], %241 {strides = array<i32>} : memref<8x2x128xf32, #tpu.memory_space<vmem>>, vector<1x2x128xf32>,
    %242 = vector.extract_strided_slice %12 {offsets = [12, 0], sizes = [2, 384], strides = [1, 1]} : vector<16x384xf32> to vector<2x384xf32>
    %cst_70 = arith.constant dense<0.000000e+00> : vector<2x384xf32>
    %243 = tpu.matmul %234, %13, %cst_70 {dimension_numbers = #tpu.dot_dimension_numbers<[1], [0], [0], [1], [0, 0, 1, 1], [], []>} : vector<2x128xf32>, vector<128x384xf32>, vector<2x384xf32> -> vector<2x384xf32>
    %244 = vector.broadcast %14 : vector<1x384xf32> to vector<2x384xf32>
    %245 = arith.addf %243, %244 : vector<2x384xf32>
    %246 = vector.extract_strided_slice %242 {offsets = [0, 0], sizes = [2, 128], strides = [1, 1]} : vector<2x384xf32> to vector<2x128xf32>
    %247 = vector.extract_strided_slice %242 {offsets = [0, 128], sizes = [2, 128], strides = [1, 1]} : vector<2x384xf32> to vector<2x128xf32>
    %248 = vector.extract_strided_slice %242 {offsets = [0, 256], sizes = [2, 128], strides = [1, 1]} : vector<2x384xf32> to vector<2x128xf32>
    %249 = vector.extract_strided_slice %245 {offsets = [0, 0], sizes = [2, 128], strides = [1, 1]} : vector<2x384xf32> to vector<2x128xf32>
    %250 = vector.extract_strided_slice %245 {offsets = [0, 128], sizes = [2, 128], strides = [1, 1]} : vector<2x384xf32> to vector<2x128xf32>
    %251 = vector.extract_strided_slice %245 {offsets = [0, 256], sizes = [2, 128], strides = [1, 1]} : vector<2x384xf32> to vector<2x128xf32>
    %252 = arith.addf %246, %249 : vector<2x128xf32>
    %253 = arith.negf %252 : vector<2x128xf32>
    %254 = math.exp %253 : vector<2x128xf32>
    %cst_71 = arith.constant 1.000000e+00 : f32
    %255 = vector.broadcast %cst_71 : f32 to vector<2x128xf32>
    %256 = arith.addf %255, %254 : vector<2x128xf32>
    %257 = arith.divf %255, %256 : vector<2x128xf32>
    %258 = arith.addf %247, %250 : vector<2x128xf32>
    %259 = arith.negf %258 : vector<2x128xf32>
    %260 = math.exp %259 : vector<2x128xf32>
    %cst_72 = arith.constant 1.000000e+00 : f32
    %261 = vector.broadcast %cst_72 : f32 to vector<2x128xf32>
    %262 = arith.addf %261, %260 : vector<2x128xf32>
    %263 = arith.divf %261, %262 : vector<2x128xf32>
    %264 = arith.mulf %257, %251 : vector<2x128xf32>
    %265 = arith.addf %248, %264 : vector<2x128xf32>
    %266 = math.tanh %265 : vector<2x128xf32>
    %cst_73 = arith.constant 1.000000e+00 : f32
    %267 = vector.broadcast %cst_73 : f32 to vector<2x128xf32>
    %268 = arith.subf %267, %263 : vector<2x128xf32>
    %269 = arith.mulf %268, %266 : vector<2x128xf32>
    %270 = arith.mulf %263, %234 : vector<2x128xf32>
    %271 = arith.addf %269, %270 : vector<2x128xf32>
    %c6_74 = arith.constant 6 : index
    %c0_75 = arith.constant 0 : index
    %c0_76 = arith.constant 0 : index
    %272 = vector.load %arg10[%c6_74, %c0_75, %c0_76] : memref<8x2x128xf32, #tpu.memory_space<vmem>>, vector<1x2x128xf32>
    %273 = vector.shape_cast %272 : vector<1x2x128xf32> to vector<2x128xf32>
    %274 = vector.shape_cast %271 : vector<2x128xf32> to vector<1x2x128xf32>
    tpu.vector_store %arg10[%c6_74, %c0_75, %c0_76], %274 {strides = array<i32>} : memref<8x2x128xf32, #tpu.memory_space<vmem>>, vector<1x2x128xf32>,
    %275 = vector.extract_strided_slice %7 {offsets = [14, 0], sizes = [2, 128], strides = [1, 1]} : vector<16x128xf32> to vector<2x128xf32>
    %c7 = arith.constant 7 : index
    %c0_77 = arith.constant 0 : index
    %c0_78 = arith.constant 0 : index
    %276 = vector.load %arg9[%c7, %c0_77, %c0_78] : memref<8x2x128xf32, #tpu.memory_space<vmem>>, vector<1x2x128xf32>
    %277 = vector.shape_cast %276 : vector<1x2x128xf32> to vector<2x128xf32>
    %278 = vector.shape_cast %275 : vector<2x128xf32> to vector<1x2x128xf32>
    tpu.vector_store %arg9[%c7, %c0_77, %c0_78], %278 {strides = array<i32>} : memref<8x2x128xf32, #tpu.memory_space<vmem>>, vector<1x2x128xf32>,
    %279 = vector.extract_strided_slice %12 {offsets = [14, 0], sizes = [2, 384], strides = [1, 1]} : vector<16x384xf32> to vector<2x384xf32>
    %cst_79 = arith.constant dense<0.000000e+00> : vector<2x384xf32>
    %280 = tpu.matmul %271, %13, %cst_79 {dimension_numbers = #tpu.dot_dimension_numbers<[1], [0], [0], [1], [0, 0, 1, 1], [], []>} : vector<2x128xf32>, vector<128x384xf32>, vector<2x384xf32> -> vector<2x384xf32>
    %281 = vector.broadcast %14 : vector<1x384xf32> to vector<2x384xf32>
    %282 = arith.addf %280, %281 : vector<2x384xf32>
    %283 = vector.extract_strided_slice %279 {offsets = [0, 0], sizes = [2, 128], strides = [1, 1]} : vector<2x384xf32> to vector<2x128xf32>
    %284 = vector.extract_strided_slice %279 {offsets = [0, 128], sizes = [2, 128], strides = [1, 1]} : vector<2x384xf32> to vector<2x128xf32>
    %285 = vector.extract_strided_slice %279 {offsets = [0, 256], sizes = [2, 128], strides = [1, 1]} : vector<2x384xf32> to vector<2x128xf32>
    %286 = vector.extract_strided_slice %282 {offsets = [0, 0], sizes = [2, 128], strides = [1, 1]} : vector<2x384xf32> to vector<2x128xf32>
    %287 = vector.extract_strided_slice %282 {offsets = [0, 128], sizes = [2, 128], strides = [1, 1]} : vector<2x384xf32> to vector<2x128xf32>
    %288 = vector.extract_strided_slice %282 {offsets = [0, 256], sizes = [2, 128], strides = [1, 1]} : vector<2x384xf32> to vector<2x128xf32>
    %289 = arith.addf %283, %286 : vector<2x128xf32>
    %290 = arith.negf %289 : vector<2x128xf32>
    %291 = math.exp %290 : vector<2x128xf32>
    %cst_80 = arith.constant 1.000000e+00 : f32
    %292 = vector.broadcast %cst_80 : f32 to vector<2x128xf32>
    %293 = arith.addf %292, %291 : vector<2x128xf32>
    %294 = arith.divf %292, %293 : vector<2x128xf32>
    %295 = arith.addf %284, %287 : vector<2x128xf32>
    %296 = arith.negf %295 : vector<2x128xf32>
    %297 = math.exp %296 : vector<2x128xf32>
    %cst_81 = arith.constant 1.000000e+00 : f32
    %298 = vector.broadcast %cst_81 : f32 to vector<2x128xf32>
    %299 = arith.addf %298, %297 : vector<2x128xf32>
    %300 = arith.divf %298, %299 : vector<2x128xf32>
    %301 = arith.mulf %294, %288 : vector<2x128xf32>
    %302 = arith.addf %285, %301 : vector<2x128xf32>
    %303 = math.tanh %302 : vector<2x128xf32>
    %cst_82 = arith.constant 1.000000e+00 : f32
    %304 = vector.broadcast %cst_82 : f32 to vector<2x128xf32>
    %305 = arith.subf %304, %300 : vector<2x128xf32>
    %306 = arith.mulf %305, %303 : vector<2x128xf32>
    %307 = arith.mulf %300, %271 : vector<2x128xf32>
    %308 = arith.addf %306, %307 : vector<2x128xf32>
    %c7_83 = arith.constant 7 : index
    %c0_84 = arith.constant 0 : index
    %c0_85 = arith.constant 0 : index
    %309 = vector.load %arg10[%c7_83, %c0_84, %c0_85] : memref<8x2x128xf32, #tpu.memory_space<vmem>>, vector<1x2x128xf32>
    %310 = vector.shape_cast %309 : vector<1x2x128xf32> to vector<2x128xf32>
    %311 = vector.shape_cast %308 : vector<2x128xf32> to vector<1x2x128xf32>
    tpu.vector_store %arg10[%c7_83, %c0_84, %c0_85], %311 {strides = array<i32>} : memref<8x2x128xf32, #tpu.memory_space<vmem>>, vector<1x2x128xf32>,
    %c0_86 = arith.constant 0 : index
    %c0_87 = arith.constant 0 : index
    %312 = vector.load %arg11[%c0_86, %c0_87] : memref<2x128xf32, #tpu.memory_space<vmem>>, vector<2x128xf32>
    tpu.vector_store %arg11[%c0_86, %c0_87], %308 {strides = array<i32>} : memref<2x128xf32, #tpu.memory_space<vmem>>, vector<2x128xf32>,
    %c0_88 = arith.constant 0 : index
    %c0_89 = arith.constant 0 : index
    %313 = vector.load %arg7[%c0_88, %c0_89] : memref<128x256xf32, #tpu.memory_space<vmem>>, vector<128x256xf32>
    %cst_90 = arith.constant dense<0.000000e+00> : vector<2x256xf32>
    %314 = tpu.matmul %308, %313, %cst_90 {dimension_numbers = #tpu.dot_dimension_numbers<[1], [0], [0], [1], [0, 0, 1, 1], [], []>} : vector<2x128xf32>, vector<128x256xf32>, vector<2x256xf32> -> vector<2x256xf32>
    %c0_91 = arith.constant 0 : index
    %c0_92 = arith.constant 0 : index
    %315 = vector.load %arg8[%c0_91, %c0_92] : memref<1x256xf32, #tpu.memory_space<vmem>>, vector<1x256xf32>
    %316 = vector.broadcast %315 : vector<1x256xf32> to vector<2x256xf32>
    %317 = arith.addf %314, %316 : vector<2x256xf32>
    %318 = vector.extract_strided_slice %317 {offsets = [0, 0], sizes = [2, 128], strides = [1, 1]} : vector<2x256xf32> to vector<2x128xf32>
    %c0_93 = arith.constant 0 : index
    %c0_94 = arith.constant 0 : index
    %319 = vector.load %arg12[%c0_93, %c0_94] : memref<2x128xf32, #tpu.memory_space<vmem>>, vector<2x128xf32>
    tpu.vector_store %arg12[%c0_93, %c0_94], %318 {strides = array<i32>} : memref<2x128xf32, #tpu.memory_space<vmem>>, vector<2x128xf32>,
    %320 = vector.extract_strided_slice %317 {offsets = [0, 128], sizes = [2, 128], strides = [1, 1]} : vector<2x256xf32> to vector<2x128xf32>
    %c0_95 = arith.constant 0 : index
    %c0_96 = arith.constant 0 : index
    %321 = vector.load %arg13[%c0_95, %c0_96] : memref<2x128xf32, #tpu.memory_space<vmem>>, vector<2x128xf32>
    tpu.vector_store %arg13[%c0_95, %c0_96], %320 {strides = array<i32>} : memref<2x128xf32, #tpu.memory_space<vmem>>, vector<2x128xf32>,
    return
  }
  func.func @transform_0(%arg0: i32) -> (i32, i32) {
    %c0_i32 = arith.constant 0 : i32
    %c0_i32_0 = arith.constant 0 : i32
    %c0_i32_1 = arith.constant 0 : i32
    return %c0_i32, %c0_i32_0 : i32, i32
  }
  func.func @transform_1(%arg0: i32) -> (i32, i32) {
    %c0_i32 = arith.constant 0 : i32
    %c0_i32_0 = arith.constant 0 : i32
    %c0_i32_1 = arith.constant 0 : i32
    return %c0_i32, %c0_i32_0 : i32, i32
  }
  func.func @transform_2(%arg0: i32) -> (i32, i32) {
    %c0_i32 = arith.constant 0 : i32
    %c0_i32_0 = arith.constant 0 : i32
    %c0_i32_1 = arith.constant 0 : i32
    return %c0_i32, %c0_i32_0 : i32, i32
  }
  func.func @transform_3(%arg0: i32) -> (i32, i32) {
    %c0_i32 = arith.constant 0 : i32
    %c0_i32_0 = arith.constant 0 : i32
    %c0_i32_1 = arith.constant 0 : i32
    return %c0_i32, %c0_i32_0 : i32, i32
  }
  func.func @transform_4(%arg0: i32) -> (i32, i32) {
    %c0_i32 = arith.constant 0 : i32
    %c0_i32_0 = arith.constant 0 : i32
    %c0_i32_1 = arith.constant 0 : i32
    return %c0_i32, %c0_i32_0 : i32, i32
  }
  func.func @transform_5(%arg0: i32) -> (i32, i32) {
    %c0_i32 = arith.constant 0 : i32
    %c0_i32_0 = arith.constant 0 : i32
    %c0_i32_1 = arith.constant 0 : i32
    return %c0_i32, %c0_i32_0 : i32, i32
  }
  func.func @transform_6(%arg0: i32) -> (i32, i32) {
    %c0_i32 = arith.constant 0 : i32
    %c0_i32_0 = arith.constant 0 : i32
    %c0_i32_1 = arith.constant 0 : i32
    return %c0_i32, %c0_i32_0 : i32, i32
  }
  func.func @transform_7(%arg0: i32) -> (i32, i32) {
    %c0_i32 = arith.constant 0 : i32
    %c0_i32_0 = arith.constant 0 : i32
    %c0_i32_1 = arith.constant 0 : i32
    return %c0_i32, %c0_i32_0 : i32, i32
  }
  func.func @transform_8(%arg0: i32) -> (i32, i32, i32) {
    %c0_i32 = arith.constant 0 : i32
    %c0_i32_0 = arith.constant 0 : i32
    %c0_i32_1 = arith.constant 0 : i32
    %c0_i32_2 = arith.constant 0 : i32
    return %c0_i32, %c0_i32_0, %c0_i32_1 : i32, i32, i32
  }
  func.func @transform_9(%arg0: i32) -> (i32, i32, i32) {
    %c0_i32 = arith.constant 0 : i32
    %c0_i32_0 = arith.constant 0 : i32
    %c0_i32_1 = arith.constant 0 : i32
    %c0_i32_2 = arith.constant 0 : i32
    return %c0_i32, %c0_i32_0, %c0_i32_1 : i32, i32, i32
  }
  func.func @transform_10(%arg0: i32) -> (i32, i32) {
    %c0_i32 = arith.constant 0 : i32
    %c0_i32_0 = arith.constant 0 : i32
    %c0_i32_1 = arith.constant 0 : i32
    return %c0_i32, %c0_i32_0 : i32, i32
  }
  func.func @transform_11(%arg0: i32) -> (i32, i32) {
    %c0_i32 = arith.constant 0 : i32
    %c0_i32_0 = arith.constant 0 : i32
    %c0_i32_1 = arith.constant 0 : i32
    return %c0_i32, %c0_i32_0 : i32, i32
  }
  func.func @transform_12(%arg0: i32) -> (i32, i32) {
    %c0_i32 = arith.constant 0 : i32
    %c0_i32_0 = arith.constant 0 : i32
    %c0_i32_1 = arith.constant 0 : i32
    return %c0_i32, %c0_i32_0 : i32, i32
  }
}

</mosaic_0001>

<llo_original>
// kernel: tpu_custom_call.1
$region0: #{tpu_custom_call.1}
  #allocation0 [shape = 'u32[]', space=smem, size = 0x4, offset = 0x4, fixed_abs, tag = 'smem constant byte address 0x4 - core index']
  #allocation1 [shape = 'u32[144,128]{1,0:T(1,128)}', space=vmem, size = 0x12000, scoped, tag = 'internal scratch']
  %s0 = inlined_call_operand.vmem [shape: s32[16,1], index: 0, kind: input, shape index: {}]
  %s1 = inlined_call_operand.hbm [shape: f32[64,128], index: 1, kind: input, shape index: {}]
  %s2 = inlined_call_operand.hbm [shape: f32[128,384], index: 2, kind: input, shape index: {}]
  %s3 = inlined_call_operand.hbm [shape: f32[128,384], index: 3, kind: input, shape index: {}]
  %s4 = inlined_call_operand.vmem [shape: f32[1,384], index: 4, kind: input, shape index: {}]
  %s5 = inlined_call_operand.vmem [shape: f32[1,384], index: 5, kind: input, shape index: {}]
  %s6 = inlined_call_operand.hbm [shape: f32[128,256], index: 6, kind: input, shape index: {}]
  %s7 = inlined_call_operand.vmem [shape: f32[1,256], index: 7, kind: input, shape index: {}]
  %s8 = inlined_call_operand.hbm [shape: f32[8,2,128], index: 8, kind: output, shape index: {0}]
  %s9 = inlined_call_operand.hbm [shape: f32[8,2,128], index: 9, kind: output, shape index: {1}]
  %s10 = inlined_call_operand.hbm [shape: f32[2,128], index: 10, kind: output, shape index: {2}]
  %s11 = inlined_call_operand.hbm [shape: f32[2,128], index: 11, kind: output, shape index: {3}]
  %s12 = inlined_call_operand.hbm [shape: f32[2,128], index: 12, kind: output, shape index: {4}]
  %13 = xla_tuple %s8, %s9, %s10, %s11, %s12
  %s14 = sld [smem:[#allocation0]]
  $region90: #{tpu_custom_call.1} parent=0
    _
  %s16 = ssub.s32 1, %s14
  %s17 = scalar_select 0, %s16, %s14
  $region1: #{tpu_custom_call.1} parent=0
    #allocation2 [shape = 'u8[32768]{0}', space=vmem, size = 0x8000, scoped, tag = 'input window, operand 1, single buffered']
    #allocation3 [shape = 's32[1]{0}', space=sflag, size = 0x4, scoped, tag = 'scoped memory for tpu_custom_call.1']
    #allocation4 [shape = 's32[1]{0}', space=sflag, size = 0x4, scoped, tag = 'scoped memory for tpu_custom_call.1']
    #allocation5 [shape = 'u8[196608]{0}', space=vmem, size = 0x30000, scoped, tag = 'input window, operand 2, single buffered']
    #allocation6 [shape = 's32[1]{0}', space=sflag, size = 0x4, scoped, tag = 'scoped memory for tpu_custom_call.1']
    #allocation7 [shape = 'u8[196608]{0}', space=vmem, size = 0x30000, scoped, tag = 'input window, operand 3, single buffered']
    #allocation8 [shape = 'u8[131072]{0}', space=vmem, size = 0x20000, scoped, tag = 'input window, operand 6, single buffered']
    #allocation9 [shape = 's32[1]{0}', space=sflag, size = 0x4, scoped, tag = 'scoped memory for tpu_custom_call.1']
    #allocation10 [shape = 'u8[8192]{0}', space=vmem, size = 0x2000, scoped, tag = 'output window, operand 0, single buffered']
    #allocation11 [shape = 'u8[8192]{0}', space=vmem, size = 0x2000, scoped, tag = 'output window, operand 1, single buffered']
    #allocation12 [shape = 's32[1]{0}', space=sflag, size = 0x4, scoped, tag = 'scoped memory for tpu_custom_call.1']
    #allocation13 [shape = 'u8[1024]{0}', space=vmem, size = 0x400, scoped, tag = 'output window, operand 2, single buffered']
    #allocation14 [shape = 'u8[1024]{0}', space=vmem, size = 0x400, scoped, tag = 'output window, operand 3, single buffered']
    #allocation15 [shape = 's32[1]{0}', space=sflag, size = 0x4, scoped, tag = 'scoped memory for tpu_custom_call.1']
    #allocation16 [shape = 'u8[1024]{0}', space=vmem, size = 0x400, scoped, tag = 'output window, operand 4, single buffered']
    %18 = vsyncpa [#allocation3], 0
    %19 = vsyncpa [#allocation6], 0
    %20 = vsyncpa [#allocation9], 0
    %21 = vsyncpa [#allocation4], 0
    %22 = vsyncpa [#allocation12], 0
    %23 = vsyncpa [#allocation15], 0
    // Predicated region
    $region2: #{tpu_custom_call.1} parent=1 // pred_check
      _
    $region3: #{tpu_custom_call.1} parent=1 // pred_check_branch
      %25 = sbr.rel (0) target = $region5
    $region4: #{tpu_custom_call.1} parent=1 // pred_region
      _
    $region5: #{tpu_custom_call.1} parent=1 // pred_fallthru
      _
    // Predicated region
    $region6: #{tpu_custom_call.1} parent=1 // pred_check
      _
    $region7: #{tpu_custom_call.1} parent=1 // pred_check_branch
      %27 = sbr.rel (0) target = $region9
    $region8: #{tpu_custom_call.1} parent=1 // pred_region
      %s29 = ssub.s32 1024, 1024
      %30 = vsyncadd [#allocation3], %s29
      %s31 = sshll.u32 [#allocation2], 4
      %s32 = int_to_ptr.vmem [resolvable:$true] %s31
      %37 = dma.hbm_to_vmem [thread:$0]  %s1, 1024, %s32, [#allocation3], 128, 128, 8
    $region9: #{tpu_custom_call.1} parent=1 // pred_fallthru
      _
    // Predicated region
    $region10: #{tpu_custom_call.1} parent=1 // pred_check
      _
    $region11: #{tpu_custom_call.1} parent=1 // pred_check_branch
      %39 = sbr.rel (0) target = $region13
    $region12: #{tpu_custom_call.1} parent=1 // pred_region
      %s41 = ssub.s32 6144, 6144
      %42 = vsyncadd [#allocation6], %s41
      %s43 = sshll.u32 [#allocation5], 4
      %s44 = int_to_ptr.vmem [resolvable:$true] %s43
      %49 = dma.hbm_to_vmem [thread:$0]  %s2, 6144, %s44, [#allocation6], 384, 384, 24
    $region13: #{tpu_custom_call.1} parent=1 // pred_fallthru
      _
    // Predicated region
    $region14: #{tpu_custom_call.1} parent=1 // pred_check
      _
    $region15: #{tpu_custom_call.1} parent=1 // pred_check_branch
      %51 = sbr.rel (0) target = $region17
    $region16: #{tpu_custom_call.1} parent=1 // pred_region
      %s53 = ssub.s32 6144, 6144
      %54 = vsyncadd [#allocation6], %s53
      %s55 = sshll.u32 [#allocation7], 4
      %s56 = int_to_ptr.vmem [resolvable:$true] %s55
      %61 = dma.hbm_to_vmem [thread:$0]  %s3, 6144, %s56, [#allocation6], 384, 384, 24
    $region17: #{tpu_custom_call.1} parent=1 // pred_fallthru
      _
    // Predicated region
    $region18: #{tpu_custom_call.1} parent=1 // pred_check
      _
    $region19: #{tpu_custom_call.1} parent=1 // pred_check_branch
      %63 = sbr.rel (0) target = $region21
    $region20: #{tpu_custom_call.1} parent=1 // pred_region
      _
    $region21: #{tpu_custom_call.1} parent=1 // pred_fallthru
      _
    // Predicated region
    $region22: #{tpu_custom_call.1} parent=1 // pred_check
      _
    $region23: #{tpu_custom_call.1} parent=1 // pred_check_branch
      %65 = sbr.rel (0) target = $region25
    $region24: #{tpu_custom_call.1} parent=1 // pred_region
      _
    $region25: #{tpu_custom_call.1} parent=1 // pred_fallthru
      _
    // Predicated region
    $region26: #{tpu_custom_call.1} parent=1 // pred_check
      _
    $region27: #{tpu_custom_call.1} parent=1 // pred_check_branch
      %67 = sbr.rel (0) target = $region29
    $region28: #{tpu_custom_call.1} parent=1 // pred_region
      %s69 = ssub.s32 4096, 4096
      %70 = vsyncadd [#allocation9], %s69
      %s71 = sshll.u32 [#allocation8], 4
      %s72 = int_to_ptr.vmem [resolvable:$true] %s71
      %77 = dma.hbm_to_vmem [thread:$0]  %s6, 4096, %s72, [#allocation9], 256, 256, 16
    $region29: #{tpu_custom_call.1} parent=1 // pred_fallthru
      _
    // Predicated region
    $region30: #{tpu_custom_call.1} parent=1 // pred_check
      _
    $region31: #{tpu_custom_call.1} parent=1 // pred_check_branch
      %79 = sbr.rel (0) target = $region33
    $region32: #{tpu_custom_call.1} parent=1 // pred_region
      _
    $region33: #{tpu_custom_call.1} parent=1 // pred_fallthru
      _
    // Predicated region
    $region34: #{tpu_custom_call.1} parent=1 // pred_check
      _
    $region35: #{tpu_custom_call.1} parent=1 // pred_check_branch
      %81 = sbr.rel (0) target = $region37
    $region36: #{tpu_custom_call.1} parent=1 // pred_region
      %82 = dma.done [#allocation3], 1024
    $region37: #{tpu_custom_call.1} parent=1 // pred_fallthru
      _
    // Predicated region
    $region38: #{tpu_custom_call.1} parent=1 // pred_check
      _
    $region39: #{tpu_custom_call.1} parent=1 // pred_check_branch
      %84 = sbr.rel (0) target = $region41
    $region40: #{tpu_custom_call.1} parent=1 // pred_region
      %85 = dma.done [#allocation6], 6144
    $region41: #{tpu_custom_call.1} parent=1 // pred_fallthru
      _
    // Predicated region
    $region42: #{tpu_custom_call.1} parent=1 // pred_check
      _
    $region43: #{tpu_custom_call.1} parent=1 // pred_check_branch
      %87 = sbr.rel (0) target = $region45
    $region44: #{tpu_custom_call.1} parent=1 // pred_region
      %88 = dma.done [#allocation6], 6144
    $region45: #{tpu_custom_call.1} parent=1 // pred_fallthru
      _
    // Predicated region
    $region46: #{tpu_custom_call.1} parent=1 // pred_check
      _
    $region47: #{tpu_custom_call.1} parent=1 // pred_check_branch
      %90 = sbr.rel (0) target = $region49
    $region48: #{tpu_custom_call.1} parent=1 // pred_region
      %91 = dma.done [#allocation9], 4096
    $region49: #{tpu_custom_call.1} parent=1 // pred_fallthru
      _
    %v92 = vld [vmem:[%s0] sm:$0xff]
    %v93 = vld [vmem:[%s0 + $0x8] sm:$0xff]
    %v94 = vlaneseq
    %v95 = vand.u32 %v94, 127
    %96 = vset.pattern.permute.xlu0 0
    %97 = vperm.xlu0 %96, %v92
    %v98 = vpop.permute.xlu0 %97
    %99 = vset.pattern.permute.xlu0 0
    %100 = vperm.xlu0 %99, %v93
    %v101 = vpop.permute.xlu0 %100
    %vm102 = vcmp.eq.s32.totalorder %v98, %v95
    %vm103 = vcmp.eq.s32.totalorder %v101, %v95
    %v104 = vsel %vm102, 1, 0
    %v105 = vsel %vm103, 1, 0
    %v106 = vcvt.s32.f32 %v104
    %v107 = vcvt.s32.f32 %v105
    %v108 = vld [vmem:[#allocation2] sm:$0xff]
    %v109 = vld [vmem:[#allocation2 + $0x8] sm:$0xff]
    %v110 = vld [vmem:[#allocation2 + $0x10] sm:$0xff]
    %v111 = vld [vmem:[#allocation2 + $0x18] sm:$0xff]
    %v112 = vld [vmem:[#allocation2 + $0x20] sm:$0xff]
    %v113 = vld [vmem:[#allocation2 + $0x28] sm:$0xff]
    %v114 = vld [vmem:[#allocation2 + $0x30] sm:$0xff]
    %v115 = vld [vmem:[#allocation2 + $0x38] sm:$0xff]
    %vm116 = vcmask 523264
    %v118 = vsel %vm116, %v106, 0
    %v121 = vsel %vm116, %v107, 0
    %123 = vmatprep.subr.mxu0 0.0
    %124 = vmatpush1.msra.mxu0 %v108
    %125 = vmatprep.subr.mxu0 0.0
    %126 = vmatpush1.msra.mxu0 %v109
    %127 = vmatprep.subr.mxu0 0.0
    %128 = vmatpush1.msra.mxu0 %v110
    %129 = vmatprep.subr.mxu0 0.0
    %130 = vmatpush1.msra.mxu0 %v111
    %131 = vmatprep.subr.mxu0 0.0
    %132 = vmatpush1.msra.mxu0 %v112
    %133 = vmatprep.subr.mxu0 0.0
    %134 = vmatpush1.msra.mxu0 %v113
    %135 = vmatprep.subr.mxu0 0.0
    %136 = vmatpush1.msra.mxu0 %v114
    %137 = vmatprep.subr.mxu0 0.0
    %138 = vmatpush1.msra.mxu0 %v115
    %139 = vmatprep.subr.mxu0 0.0
    %140 = vmatpush1.msra.mxu0 0.0
    %141 = vmatprep.subr.mxu0 0.0
    %142 = vmatpush1.msra.mxu0 0.0
    %143 = vmatprep.subr.mxu0 0.0
    %144 = vmatpush1.msra.mxu0 0.0
    %145 = vmatprep.subr.mxu0 0.0
    %146 = vmatpush1.msra.mxu0 0.0
    %147 = vmatprep.subr.mxu0 0.0
    %148 = vmatpush1.msra.mxu0 0.0
    %149 = vmatprep.subr.mxu0 0.0
    %150 = vmatpush1.msra.mxu0 0.0
    %151 = vmatprep.subr.mxu0 0.0
    %152 = vmatpush1.msra.mxu0 0.0
    %153 = vmatprep.subr.mxu0 0.0
    %154 = vmatpush1.msra.mxu0 0.0
    %155 = vmatprep.subr.mxu0 0.0
    %156 = vmatpush1.msra.mxu0 0.0
    %157 = vmatprep.subr.mxu0 0.0
    %158 = vmatpush1.msra.mxu0 0.0
    %159 = vmatprep.subr.mxu0 0.0
    %160 = vmatpush1.msra.mxu0 0.0
    %161 = vmatprep.subr.mxu0 0.0
    %162 = vmatpush1.msra.mxu0 0.0
    %163 = vmatprep.subr.mxu0 0.0
    %164 = vmatpush1.msra.mxu0 0.0
    %165 = vmatprep.subr.mxu0 0.0
    %166 = vmatpush1.msra.mxu0 0.0
    %167 = vmatprep.subr.mxu0 0.0
    %168 = vmatpush1.msra.mxu0 0.0
    %169 = vmatprep.subr.mxu0 0.0
    %170 = vmatpush1.msra.mxu0 0.0
    %171 = vmatprep.subr.mxu0 0.0
    %172 = vmatpush1.msra.mxu0 0.0
    %173 = vmatprep.subr.mxu0 0.0
    %174 = vmatpush1.msra.mxu0 0.0
    %175 = vmatprep.subr.mxu0 0.0
    %176 = vmatpush1.msra.mxu0 0.0
    %177 = vmatprep.subr.mxu0 0.0
    %178 = vmatpush1.msra.mxu0 0.0
    %179 = vmatprep.subr.mxu0 0.0
    %180 = vmatpush1.msra.mxu0 0.0
    %181 = vmatprep.subr.mxu0 0.0
    %182 = vmatpush1.msra.mxu0 0.0
    %183 = vmatprep.subr.mxu0 0.0
    %184 = vmatpush1.msra.mxu0 0.0
    %185 = vmatprep.subr.mxu0 0.0
    %186 = vmatpush1.msra.mxu0 0.0
    %187 = vmatprep.mubr.f32.mxu0 0.0
    %188 = vmatmul.mubr.f32.gmra.mrb[0].mxu0 %v118
    %v189 = vpop.f32.mrb[0].mxu0
    %v190 = vadd.f32 0.0, %v189
    %v191 = vpop.f32.mrb[0].mxu0
    %192 = vmatprep.mubr.f32.mxu0 0.0
    %193 = vmatmul.mubr.f32.gmra.mrb[0].mxu0 %v121
    %v194 = vpop.f32.mrb[0].mxu0
    %v195 = vadd.f32 0.0, %v194
    %v196 = vpop.f32.mrb[0].mxu0
    %197 = vdwg.mxu0
    %v198 = vld [vmem:[#allocation5] sm:$0xff]
    %v199 = vld [vmem:[#allocation5 + $0x8] sm:$0xff]
    %v200 = vld [vmem:[#allocation5 + $0x10] sm:$0xff]
    %v201 = vld [vmem:[#allocation5 + $0x18] sm:$0xff]
    %v202 = vld [vmem:[#allocation5 + $0x20] sm:$0xff]
    %v203 = vld [vmem:[#allocation5 + $0x28] sm:$0xff]
    %v204 = vld [vmem:[#allocation5 + $0x30] sm:$0xff]
    %v205 = vld [vmem:[#allocation5 + $0x38] sm:$0xff]
    %v206 = vld [vmem:[#allocation5 + $0x40] sm:$0xff]
    %v207 = vld [vmem:[#allocation5 + $0x48] sm:$0xff]
    %v208 = vld [vmem:[#allocation5 + $0x50] sm:$0xff]
    %v209 = vld [vmem:[#allocation5 + $0x58] sm:$0xff]
    %v210 = vld [vmem:[#allocation5 + $0x60] sm:$0xff]
    %v211 = vld [vmem:[#allocation5 + $0x68] sm:$0xff]
    %v212 = vld [vmem:[#allocation5 + $0x70] sm:$0xff]
    %v213 = vld [vmem:[#allocation5 + $0x78] sm:$0xff]
    %v214 = vld [vmem:[#allocation5 + $0x80] sm:$0xff]
    %v215 = vld [vmem:[#allocation5 + $0x88] sm:$0xff]
    %v216 = vld [vmem:[#allocation5 + $0x90] sm:$0xff]
    %v217 = vld [vmem:[#allocation5 + $0x98] sm:$0xff]
    %v218 = vld [vmem:[#allocation5 + $0xa0] sm:$0xff]
    %v219 = vld [vmem:[#allocation5 + $0xa8] sm:$0xff]
    %v220 = vld [vmem:[#allocation5 + $0xb0] sm:$0xff]
    %v221 = vld [vmem:[#allocation5 + $0xb8] sm:$0xff]
    %v222 = vld [vmem:[#allocation5 + $0xc0] sm:$0xff]
    %v223 = vld [vmem:[#allocation5 + $0xc8] sm:$0xff]
    %v224 = vld [vmem:[#allocation5 + $0xd0] sm:$0xff]
    %v225 = vld [vmem:[#allocation5 + $0xd8] sm:$0xff]
    %v226 = vld [vmem:[#allocation5 + $0xe0] sm:$0xff]
    %v227 = vld [vmem:[#allocation5 + $0xe8] sm:$0xff]
    %v228 = vld [vmem:[#allocation5 + $0xf0] sm:$0xff]
    %v229 = vld [vmem:[#allocation5 + $0xf8] sm:$0xff]
    %v230 = vld [vmem:[#allocation5 + $0x100] sm:$0xff]
    %v231 = vld [vmem:[#allocation5 + $0x108] sm:$0xff]
    %v232 = vld [vmem:[#allocation5 + $0x110] sm:$0xff]
    %v233 = vld [vmem:[#allocation5 + $0x118] sm:$0xff]
    %v234 = vld [vmem:[#allocation5 + $0x120] sm:$0xff]
    %v235 = vld [vmem:[#allocation5 + $0x128] sm:$0xff]
    %v236 = vld [vmem:[#allocation5 + $0x130] sm:$0xff]
    %v237 = vld [vmem:[#allocation5 + $0x138] sm:$0xff]
    %v238 = vld [vmem:[#allocation5 + $0x140] sm:$0xff]
    %v239 = vld [vmem:[#allocation5 + $0x148] sm:$0xff]
    %v240 = vld [vmem:[#allocation5 + $0x150] sm:$0xff]
    %v241 = vld [vmem:[#allocation5 + $0x158] sm:$0xff]
    %v242 = vld [vmem:[#allocation5 + $0x160] sm:$0xff]
    %v243 = vld [vmem:[#allocation5 + $0x168] sm:$0xff]
    %v244 = vld [vmem:[#allocation5 + $0x170] sm:$0xff]
    %v245 = vld [vmem:[#allocation5 + $0x178] sm:$0xff]
    %v246 = vld [vmem:[%s4] sm:$0x7]
    %v248 = vlaneseq
    %v249 = vshrl.u32 %v248, 7
    %v250 = vsub.s32 0, %v249
    %v251 = vrot.slane %v246, %v250
    %v252 = vlaneseq
    %v253 = vshrl.u32 %v252, 7
    %v254 = vsub.s32 1, %v253
    %v255 = vrot.slane %v246, %v254
    %v256 = vlaneseq
    %v257 = vshrl.u32 %v256, 7
    %v258 = vsub.s32 2, %v257
    %v259 = vrot.slane %v246, %v258
    %263 = vmatprep.subr.mxu0 %v199
    %264 = vmatpush1.msra.mxu0 %v198
    %265 = vmatprep.subr.mxu0 %v202
    %266 = vmatpush1.msra.mxu0 %v201
    %267 = vmatprep.subr.mxu0 %v205
    %268 = vmatpush1.msra.mxu0 %v204
    %269 = vmatprep.subr.mxu0 %v208
    %270 = vmatpush1.msra.mxu0 %v207
    %271 = vmatprep.subr.mxu0 %v211
    %272 = vmatpush1.msra.mxu0 %v210
    %273 = vmatprep.subr.mxu0 %v214
    %274 = vmatpush1.msra.mxu0 %v213
    %275 = vmatprep.subr.mxu0 %v217
    %276 = vmatpush1.msra.mxu0 %v216
    %277 = vmatprep.subr.mxu0 %v220
    %278 = vmatpush1.msra.mxu0 %v219
    %279 = vmatprep.subr.mxu0 %v223
    %280 = vmatpush1.msra.mxu0 %v222
    %281 = vmatprep.subr.mxu0 %v226
    %282 = vmatpush1.msra.mxu0 %v225
    %283 = vmatprep.subr.mxu0 %v229
    %284 = vmatpush1.msra.mxu0 %v228
    %285 = vmatprep.subr.mxu0 %v232
    %286 = vmatpush1.msra.mxu0 %v231
    %287 = vmatprep.subr.mxu0 %v235
    %288 = vmatpush1.msra.mxu0 %v234
    %289 = vmatprep.subr.mxu0 %v238
    %290 = vmatpush1.msra.mxu0 %v237
    %291 = vmatprep.subr.mxu0 %v241
    %292 = vmatpush1.msra.mxu0 %v240
    %293 = vmatprep.subr.mxu0 %v244
    %294 = vmatpush1.msra.mxu0 %v243
    %295 = vmatprep.subr.mxu0 0.0
    %296 = vmatpush1.msra.mxu0 0.0
    %297 = vmatprep.subr.mxu0 0.0
    %298 = vmatpush1.msra.mxu0 0.0
    %299 = vmatprep.subr.mxu0 0.0
    %300 = vmatpush1.msra.mxu0 0.0
    %301 = vmatprep.subr.mxu0 0.0
    %302 = vmatpush1.msra.mxu0 0.0
    %303 = vmatprep.subr.mxu0 0.0
    %304 = vmatpush1.msra.mxu0 0.0
    %305 = vmatprep.subr.mxu0 0.0
    %306 = vmatpush1.msra.mxu0 0.0
    %307 = vmatprep.subr.mxu0 0.0
    %308 = vmatpush1.msra.mxu0 0.0
    %309 = vmatprep.subr.mxu0 0.0
    %310 = vmatpush1.msra.mxu0 0.0
    %311 = vmatprep.subr.mxu0 0.0
    %312 = vmatpush1.msra.mxu0 0.0
    %313 = vmatprep.subr.mxu0 0.0
    %314 = vmatpush1.msra.mxu0 0.0
    %315 = vmatprep.subr.mxu0 0.0
    %316 = vmatpush1.msra.mxu0 0.0
    %317 = vmatprep.subr.mxu0 0.0
    %318 = vmatpush1.msra.mxu0 0.0
    %319 = vmatprep.subr.mxu0 0.0
    %320 = vmatpush1.msra.mxu0 0.0
    %321 = vmatprep.subr.mxu0 0.0
    %322 = vmatpush1.msra.mxu0 0.0
    %323 = vmatprep.subr.mxu0 0.0
    %324 = vmatpush1.msra.mxu0 0.0
    %325 = vmatprep.subr.mxu0 0.0
    %326 = vmatpush1.msra.mxu0 0.0
    %327 = vmatprep.mubr.f32.mxu0 0.0
    %328 = vmatmul.mubr.f32.gmra.mrb[0].mxu0 %v190
    %v329 = vpop.f32.mrb[0].mxu0
    %v330 = vadd.f32 %v251, %v329
    %v331 = vpop.f32.mrb[0].mxu0
    %v332 = vadd.f32 %v255, %v331
    %333 = vmatprep.mubr.f32.mxu0 0.0
    %334 = vmatmul.mubr.f32.gmra.mrb[0].mxu0 %v195
    %v335 = vpop.f32.mrb[0].mxu0
    %v336 = vadd.f32 %v251, %v335
    %v337 = vpop.f32.mrb[0].mxu0
    %v338 = vadd.f32 %v255, %v337
    %339 = vdwg.mxu0
    %340 = vmatprep.subr.mxu0 0.0
    %341 = vmatpush1.msra.mxu0 %v200
    %342 = vmatprep.subr.mxu0 0.0
    %343 = vmatpush1.msra.mxu0 %v203
    %344 = vmatprep.subr.mxu0 0.0
    %345 = vmatpush1.msra.mxu0 %v206
    %346 = vmatprep.subr.mxu0 0.0
    %347 = vmatpush1.msra.mxu0 %v209
    %348 = vmatprep.subr.mxu0 0.0
    %349 = vmatpush1.msra.mxu0 %v212
    %350 = vmatprep.subr.mxu0 0.0
    %351 = vmatpush1.msra.mxu0 %v215
    %352 = vmatprep.subr.mxu0 0.0
    %353 = vmatpush1.msra.mxu0 %v218
    %354 = vmatprep.subr.mxu0 0.0
    %355 = vmatpush1.msra.mxu0 %v221
    %356 = vmatprep.subr.mxu0 0.0
    %357 = vmatpush1.msra.mxu0 %v224
    %358 = vmatprep.subr.mxu0 0.0
    %359 = vmatpush1.msra.mxu0 %v227
    %360 = vmatprep.subr.mxu0 0.0
    %361 = vmatpush1.msra.mxu0 %v230
    %362 = vmatprep.subr.mxu0 0.0
    %363 = vmatpush1.msra.mxu0 %v233
    %364 = vmatprep.subr.mxu0 0.0
    %365 = vmatpush1.msra.mxu0 %v236
    %366 = vmatprep.subr.mxu0 0.0
    %367 = vmatpush1.msra.mxu0 %v239
    %368 = vmatprep.subr.mxu0 0.0
    %369 = vmatpush1.msra.mxu0 %v242
    %370 = vmatprep.subr.mxu0 0.0
    %371 = vmatpush1.msra.mxu0 %v245
    %372 = vmatprep.subr.mxu0 0.0
    %373 = vmatpush1.msra.mxu0 0.0
    %374 = vmatprep.subr.mxu0 0.0
    %375 = vmatpush1.msra.mxu0 0.0
    %376 = vmatprep.subr.mxu0 0.0
    %377 = vmatpush1.msra.mxu0 0.0
    %378 = vmatprep.subr.mxu0 0.0
    %379 = vmatpush1.msra.mxu0 0.0
    %380 = vmatprep.subr.mxu0 0.0
    %381 = vmatpush1.msra.mxu0 0.0
    %382 = vmatprep.subr.mxu0 0.0
    %383 = vmatpush1.msra.mxu0 0.0
    %384 = vmatprep.subr.mxu0 0.0
    %385 = vmatpush1.msra.mxu0 0.0
    %386 = vmatprep.subr.mxu0 0.0
    %387 = vmatpush1.msra.mxu0 0.0
    %388 = vmatprep.subr.mxu0 0.0
    %389 = vmatpush1.msra.mxu0 0.0
    %390 = vmatprep.subr.mxu0 0.0
    %391 = vmatpush1.msra.mxu0 0.0
    %392 = vmatprep.subr.mxu0 0.0
    %393 = vmatpush1.msra.mxu0 0.0
    %394 = vmatprep.subr.mxu0 0.0
    %395 = vmatpush1.msra.mxu0 0.0
    %396 = vmatprep.subr.mxu0 0.0
    %397 = vmatpush1.msra.mxu0 0.0
    %398 = vmatprep.subr.mxu0 0.0
    %399 = vmatpush1.msra.mxu0 0.0
    %400 = vmatprep.subr.mxu0 0.0
    %401 = vmatpush1.msra.mxu0 0.0
    %402 = vmatprep.subr.mxu0 0.0
    %403 = vmatpush1.msra.mxu0 0.0
    %404 = vmatprep.mubr.f32.mxu0 0.0
    %405 = vmatmul.mubr.f32.gmra.mrb[0].mxu0 %v190
    %v406 = vpop.f32.mrb[0].mxu0
    %v407 = vadd.f32 %v259, %v406
    %v408 = vpop.f32.mrb[0].mxu0
    %409 = vmatprep.mubr.f32.mxu0 0.0
    %410 = vmatmul.mubr.f32.gmra.mrb[0].mxu0 %v195
    %v411 = vpop.f32.mrb[0].mxu0
    %v412 = vadd.f32 %v259, %v411
    %v413 = vpop.f32.mrb[0].mxu0
    %414 = vdwg.mxu0
    %v415 = vld [vmem:[#allocation7] sm:$0xff]
    %v416 = vld [vmem:[#allocation7 + $0x8] sm:$0xff]
    %v417 = vld [vmem:[#allocation7 + $0x10] sm:$0xff]
    %v418 = vld [vmem:[#allocation7 + $0x18] sm:$0xff]
    %v419 = vld [vmem:[#allocation7 + $0x20] sm:$0xff]
    %v420 = vld [vmem:[#allocation7 + $0x28] sm:$0xff]
    %v421 = vld [vmem:[#allocation7 + $0x30] sm:$0xff]
    %v422 = vld [vmem:[#allocation7 + $0x38] sm:$0xff]
    %v423 = vld [vmem:[#allocation7 + $0x40] sm:$0xff]
    %v424 = vld [vmem:[#allocation7 + $0x48] sm:$0xff]
    %v425 = vld [vmem:[#allocation7 + $0x50] sm:$0xff]
    %v426 = vld [vmem:[#allocation7 + $0x58] sm:$0xff]
    %v427 = vld [vmem:[#allocation7 + $0x60] sm:$0xff]
    %v428 = vld [vmem:[#allocation7 + $0x68] sm:$0xff]
    %v429 = vld [vmem:[#allocation7 + $0x70] sm:$0xff]
    %v430 = vld [vmem:[#allocation7 + $0x78] sm:$0xff]
    %v431 = vld [vmem:[#allocation7 + $0x80] sm:$0xff]
    %v432 = vld [vmem:[#allocation7 + $0x88] sm:$0xff]
    %v433 = vld [vmem:[#allocation7 + $0x90] sm:$0xff]
    %v434 = vld [vmem:[#allocation7 + $0x98] sm:$0xff]
    %v435 = vld [vmem:[#allocation7 + $0xa0] sm:$0xff]
    %v436 = vld [vmem:[#allocation7 + $0xa8] sm:$0xff]
    %v437 = vld [vmem:[#allocation7 + $0xb0] sm:$0xff]
    %v438 = vld [vmem:[#allocation7 + $0xb8] sm:$0xff]
    %v439 = vld [vmem:[#allocation7 + $0xc0] sm:$0xff]
    %v440 = vld [vmem:[#allocation7 + $0xc8] sm:$0xff]
    %v441 = vld [vmem:[#allocation7 + $0xd0] sm:$0xff]
    %v442 = vld [vmem:[#allocation7 + $0xd8] sm:$0xff]
    %v443 = vld [vmem:[#allocation7 + $0xe0] sm:$0xff]
    %v444 = vld [vmem:[#allocation7 + $0xe8] sm:$0xff]
    %v445 = vld [vmem:[#allocation7 + $0xf0] sm:$0xff]
    %v446 = vld [vmem:[#allocation7 + $0xf8] sm:$0xff]
    %v447 = vld [vmem:[#allocation7 + $0x100] sm:$0xff]
    %v448 = vld [vmem:[#allocation7 + $0x108] sm:$0xff]
    %v449 = vld [vmem:[#allocation7 + $0x110] sm:$0xff]
    %v450 = vld [vmem:[#allocation7 + $0x118] sm:$0xff]
    %v451 = vld [vmem:[#allocation7 + $0x120] sm:$0xff]
    %v452 = vld [vmem:[#allocation7 + $0x128] sm:$0xff]
    %v453 = vld [vmem:[#allocation7 + $0x130] sm:$0xff]
    %v454 = vld [vmem:[#allocation7 + $0x138] sm:$0xff]
    %v455 = vld [vmem:[#allocation7 + $0x140] sm:$0xff]
    %v456 = vld [vmem:[#allocation7 + $0x148] sm:$0xff]
    %v457 = vld [vmem:[#allocation7 + $0x150] sm:$0xff]
    %v458 = vld [vmem:[#allocation7 + $0x158] sm:$0xff]
    %v459 = vld [vmem:[#allocation7 + $0x160] sm:$0xff]
    %v460 = vld [vmem:[#allocation7 + $0x168] sm:$0xff]
    %v461 = vld [vmem:[#allocation7 + $0x170] sm:$0xff]
    %v462 = vld [vmem:[#allocation7 + $0x178] sm:$0xff]
    %v463 = vld [vmem:[%s5] sm:$0x7]
    %464 = vst [vmem:[#allocation10] sm:$0x3] %v190
    %v466 = vlaneseq
    %v467 = vshrl.u32 %v466, 7
    %v468 = vsub.s32 0, %v467
    %v469 = vrot.slane %v463, %v468
    %v470 = vlaneseq
    %v471 = vshrl.u32 %v470, 7
    %v472 = vsub.s32 1, %v471
    %v473 = vrot.slane %v463, %v472
    %v474 = vlaneseq
    %v475 = vshrl.u32 %v474, 7
    %v476 = vsub.s32 2, %v475
    %v477 = vrot.slane %v463, %v476
    %481 = vmatprep.subr.mxu0 %v416
    %482 = vmatpush1.msra.mxu0 %v415
    %483 = vmatprep.subr.mxu0 %v419
    %484 = vmatpush1.msra.mxu0 %v418
    %485 = vmatprep.subr.mxu0 %v422
    %486 = vmatpush1.msra.mxu0 %v421
    %487 = vmatprep.subr.mxu0 %v425
    %488 = vmatpush1.msra.mxu0 %v424
    %489 = vmatprep.subr.mxu0 %v428
    %490 = vmatpush1.msra.mxu0 %v427
    %491 = vmatprep.subr.mxu0 %v431
    %492 = vmatpush1.msra.mxu0 %v430
    %493 = vmatprep.subr.mxu0 %v434
    %494 = vmatpush1.msra.mxu0 %v433
    %495 = vmatprep.subr.mxu0 %v437
    %496 = vmatpush1.msra.mxu0 %v436
    %497 = vmatprep.subr.mxu0 %v440
    %498 = vmatpush1.msra.mxu0 %v439
    %499 = vmatprep.subr.mxu0 %v443
    %500 = vmatpush1.msra.mxu0 %v442
    %501 = vmatprep.subr.mxu0 %v446
    %502 = vmatpush1.msra.mxu0 %v445
    %503 = vmatprep.subr.mxu0 %v449
    %504 = vmatpush1.msra.mxu0 %v448
    %505 = vmatprep.subr.mxu0 %v452
    %506 = vmatpush1.msra.mxu0 %v451
    %507 = vmatprep.subr.mxu0 %v455
    %508 = vmatpush1.msra.mxu0 %v454
    %509 = vmatprep.subr.mxu0 %v458
    %510 = vmatpush1.msra.mxu0 %v457
    %511 = vmatprep.subr.mxu0 %v461
    %512 = vmatpush1.msra.mxu0 %v460
    %513 = vmatprep.subr.mxu0 0.0
    %514 = vmatpush1.msra.mxu0 0.0
    %515 = vmatprep.subr.mxu0 0.0
    %516 = vmatpush1.msra.mxu0 0.0
    %517 = vmatprep.subr.mxu0 0.0
    %518 = vmatpush1.msra.mxu0 0.0
    %519 = vmatprep.subr.mxu0 0.0
    %520 = vmatpush1.msra.mxu0 0.0
    %521 = vmatprep.subr.mxu0 0.0
    %522 = vmatpush1.msra.mxu0 0.0
    %523 = vmatprep.subr.mxu0 0.0
    %524 = vmatpush1.msra.mxu0 0.0
    %525 = vmatprep.subr.mxu0 0.0
    %526 = vmatpush1.msra.mxu0 0.0
    %527 = vmatprep.subr.mxu0 0.0
    %528 = vmatpush1.msra.mxu0 0.0
    %529 = vmatprep.subr.mxu0 0.0
    %530 = vmatpush1.msra.mxu0 0.0
    %531 = vmatprep.subr.mxu0 0.0
    %532 = vmatpush1.msra.mxu0 0.0
    %533 = vmatprep.subr.mxu0 0.0
    %534 = vmatpush1.msra.mxu0 0.0
    %535 = vmatprep.subr.mxu0 0.0
    %536 = vmatpush1.msra.mxu0 0.0
    %537 = vmatprep.subr.mxu0 0.0
    %538 = vmatpush1.msra.mxu0 0.0
    %539 = vmatprep.subr.mxu0 0.0
    %540 = vmatpush1.msra.mxu0 0.0
    %541 = vmatprep.subr.mxu0 0.0
    %542 = vmatpush1.msra.mxu0 0.0
    %543 = vmatprep.subr.mxu0 0.0
    %544 = vmatpush1.msra.mxu0 0.0
    %545 = vmatprep.mubr.f32.mxu0 0.0
    %546 = vmatmul.mubr.f32.gmra.mrb[0].mxu0 0.0
    %v547 = vpop.f32.mrb[0].mxu0
    %v548 = vadd.f32 %v469, %v547
    %v549 = vpop.f32.mrb[0].mxu0
    %v550 = vadd.f32 %v473, %v549
    %551 = vdwg.mxu0
    %552 = vmatprep.subr.mxu0 0.0
    %553 = vmatpush1.msra.mxu0 %v417
    %554 = vmatprep.subr.mxu0 0.0
    %555 = vmatpush1.msra.mxu0 %v420
    %556 = vmatprep.subr.mxu0 0.0
    %557 = vmatpush1.msra.mxu0 %v423
    %558 = vmatprep.subr.mxu0 0.0
    %559 = vmatpush1.msra.mxu0 %v426
    %560 = vmatprep.subr.mxu0 0.0
    %561 = vmatpush1.msra.mxu0 %v429
    %562 = vmatprep.subr.mxu0 0.0
    %563 = vmatpush1.msra.mxu0 %v432
    %564 = vmatprep.subr.mxu0 0.0
    %565 = vmatpush1.msra.mxu0 %v435
    %566 = vmatprep.subr.mxu0 0.0
    %567 = vmatpush1.msra.mxu0 %v438
    %568 = vmatprep.subr.mxu0 0.0
    %569 = vmatpush1.msra.mxu0 %v441
    %570 = vmatprep.subr.mxu0 0.0
    %571 = vmatpush1.msra.mxu0 %v444
    %572 = vmatprep.subr.mxu0 0.0
    %573 = vmatpush1.msra.mxu0 %v447
    %574 = vmatprep.subr.mxu0 0.0
    %575 = vmatpush1.msra.mxu0 %v450
    %576 = vmatprep.subr.mxu0 0.0
    %577 = vmatpush1.msra.mxu0 %v453
    %578 = vmatprep.subr.mxu0 0.0
    %579 = vmatpush1.msra.mxu0 %v456
    %580 = vmatprep.subr.mxu0 0.0
    %581 = vmatpush1.msra.mxu0 %v459
    %582 = vmatprep.subr.mxu0 0.0
    %583 = vmatpush1.msra.mxu0 %v462
    %584 = vmatprep.subr.mxu0 0.0
    %585 = vmatpush1.msra.mxu0 0.0
    %586 = vmatprep.subr.mxu0 0.0
    %587 = vmatpush1.msra.mxu0 0.0
    %588 = vmatprep.subr.mxu0 0.0
    %589 = vmatpush1.msra.mxu0 0.0
    %590 = vmatprep.subr.mxu0 0.0
    %591 = vmatpush1.msra.mxu0 0.0
    %592 = vmatprep.subr.mxu0 0.0
    %593 = vmatpush1.msra.mxu0 0.0
    %594 = vmatprep.subr.mxu0 0.0
    %595 = vmatpush1.msra.mxu0 0.0
    %596 = vmatprep.subr.mxu0 0.0
    %597 = vmatpush1.msra.mxu0 0.0
    %598 = vmatprep.subr.mxu0 0.0
    %599 = vmatpush1.msra.mxu0 0.0
    %600 = vmatprep.subr.mxu0 0.0
    %601 = vmatpush1.msra.mxu0 0.0
    %602 = vmatprep.subr.mxu0 0.0
    %603 = vmatpush1.msra.mxu0 0.0
    %604 = vmatprep.subr.mxu0 0.0
    %605 = vmatpush1.msra.mxu0 0.0
    %606 = vmatprep.subr.mxu0 0.0
    %607 = vmatpush1.msra.mxu0 0.0
    %608 = vmatprep.subr.mxu0 0.0
    %609 = vmatpush1.msra.mxu0 0.0
    %610 = vmatprep.subr.mxu0 0.0
    %611 = vmatpush1.msra.mxu0 0.0
    %612 = vmatprep.subr.mxu0 0.0
    %613 = vmatpush1.msra.mxu0 0.0
    %614 = vmatprep.subr.mxu0 0.0
    %615 = vmatpush1.msra.mxu0 0.0
    %616 = vmatprep.mubr.f32.mxu0 0.0
    %617 = vmatmul.mubr.f32.gmra.mrb[0].mxu0 0.0
    %v618 = vpop.f32.mrb[0].mxu0
    %v619 = vadd.f32 %v477, %v618
    %v620 = vpop.f32.mrb[0].mxu0
    %621 = vdwg.mxu0
    %v622 = vadd.f32 %v330, %v548
    %v623 = vxor.u32 %v622, 2147483648
    %v624 = vmul.f32 %v623, 1.442695
    %v625 = vpow.pop %v624
    %v626 = vadd.f32 %v625, 1.0
    %v627 = vrcp.pop %v626
    %v628 = vmul.f32 1.0, %v627
    %v629 = vadd.f32 %v332, %v550
    %v630 = vxor.u32 %v629, 2147483648
    %v631 = vmul.f32 %v630, 1.442695
    %v632 = vpow.pop %v631
    %v633 = vadd.f32 %v632, 1.0
    %v634 = vrcp.pop %v633
    %v635 = vmul.f32 1.0, %v634
    %v636 = vmul.f32 %v628, %v619
    %v637 = vadd.f32 %v407, %v636
    %v638 = vtanh.pop %v637
    %v639 = vsub.f32 1.0, %v635
    %v640 = vmul.f32 %v639, %v638
    %v641 = vmul.f32 %v635, 0.0
    %v642 = vadd.f32 %v640, %v641
    %643 = vst [vmem:[#allocation11] sm:$0x3] %v642
    %s644 = scalar_lea.vmem [#allocation10], 2
    %645 = vst [vmem:[%s644 - $0x2] sm:$0xc] %v190
    %646 = vmatprep.subr.mxu0 %v416
    %647 = vmatpush1.msra.mxu0 %v415
    %648 = vmatprep.subr.mxu0 %v419
    %649 = vmatpush1.msra.mxu0 %v418
    %650 = vmatprep.subr.mxu0 %v422
    %651 = vmatpush1.msra.mxu0 %v421
    %652 = vmatprep.subr.mxu0 %v425
    %653 = vmatpush1.msra.mxu0 %v424
    %654 = vmatprep.subr.mxu0 %v428
    %655 = vmatpush1.msra.mxu0 %v427
    %656 = vmatprep.subr.mxu0 %v431
    %657 = vmatpush1.msra.mxu0 %v430
    %658 = vmatprep.subr.mxu0 %v434
    %659 = vmatpush1.msra.mxu0 %v433
    %660 = vmatprep.subr.mxu0 %v437
    %661 = vmatpush1.msra.mxu0 %v436
    %662 = vmatprep.subr.mxu0 %v440
    %663 = vmatpush1.msra.mxu0 %v439
    %664 = vmatprep.subr.mxu0 %v443
    %665 = vmatpush1.msra.mxu0 %v442
    %666 = vmatprep.subr.mxu0 %v446
    %667 = vmatpush1.msra.mxu0 %v445
    %668 = vmatprep.subr.mxu0 %v449
    %669 = vmatpush1.msra.mxu0 %v448
    %670 = vmatprep.subr.mxu0 %v452
    %671 = vmatpush1.msra.mxu0 %v451
    %672 = vmatprep.subr.mxu0 %v455
    %673 = vmatpush1.msra.mxu0 %v454
    %674 = vmatprep.subr.mxu0 %v458
    %675 = vmatpush1.msra.mxu0 %v457
    %676 = vmatprep.subr.mxu0 %v461
    %677 = vmatpush1.msra.mxu0 %v460
    %678 = vmatprep.subr.mxu0 0.0
    %679 = vmatpush1.msra.mxu0 0.0
    %680 = vmatprep.subr.mxu0 0.0
    %681 = vmatpush1.msra.mxu0 0.0
    %682 = vmatprep.subr.mxu0 0.0
    %683 = vmatpush1.msra.mxu0 0.0
    %684 = vmatprep.subr.mxu0 0.0
    %685 = vmatpush1.msra.mxu0 0.0
    %686 = vmatprep.subr.mxu0 0.0
    %687 = vmatpush1.msra.mxu0 0.0
    %688 = vmatprep.subr.mxu0 0.0
    %689 = vmatpush1.msra.mxu0 0.0
    %690 = vmatprep.subr.mxu0 0.0
    %691 = vmatpush1.msra.mxu0 0.0
    %692 = vmatprep.subr.mxu0 0.0
    %693 = vmatpush1.msra.mxu0 0.0
    %694 = vmatprep.subr.mxu0 0.0
    %695 = vmatpush1.msra.mxu0 0.0
    %696 = vmatprep.subr.mxu0 0.0
    %697 = vmatpush1.msra.mxu0 0.0
    %698 = vmatprep.subr.mxu0 0.0
    %699 = vmatpush1.msra.mxu0 0.0
    %700 = vmatprep.subr.mxu0 0.0
    %701 = vmatpush1.msra.mxu0 0.0
    %702 = vmatprep.subr.mxu0 0.0
    %703 = vmatpush1.msra.mxu0 0.0
    %704 = vmatprep.subr.mxu0 0.0
    %705 = vmatpush1.msra.mxu0 0.0
    %706 = vmatprep.subr.mxu0 0.0
    %707 = vmatpush1.msra.mxu0 0.0
    %708 = vmatprep.subr.mxu0 0.0
    %709 = vmatpush1.msra.mxu0 0.0
    %710 = vmatprep.mubr.f32.mxu0 0.0
    %711 = vmatmul.mubr.f32.gmra.mrb[0].mxu0 %v642
    %v712 = vpop.f32.mrb[0].mxu0
    %v713 = vadd.f32 %v469, %v712
    %v714 = vpop.f32.mrb[0].mxu0
    %v715 = vadd.f32 %v473, %v714
    %716 = vdwg.mxu0
    %717 = vmatprep.subr.mxu0 0.0
    %718 = vmatpush1.msra.mxu0 %v417
    %719 = vmatprep.subr.mxu0 0.0
    %720 = vmatpush1.msra.mxu0 %v420
    %721 = vmatprep.subr.mxu0 0.0
    %722 = vmatpush1.msra.mxu0 %v423
    %723 = vmatprep.subr.mxu0 0.0
    %724 = vmatpush1.msra.mxu0 %v426
    %725 = vmatprep.subr.mxu0 0.0
    %726 = vmatpush1.msra.mxu0 %v429
    %727 = vmatprep.subr.mxu0 0.0
    %728 = vmatpush1.msra.mxu0 %v432
    %729 = vmatprep.subr.mxu0 0.0
    %730 = vmatpush1.msra.mxu0 %v435
    %731 = vmatprep.subr.mxu0 0.0
    %732 = vmatpush1.msra.mxu0 %v438
    %733 = vmatprep.subr.mxu0 0.0
    %734 = vmatpush1.msra.mxu0 %v441
    %735 = vmatprep.subr.mxu0 0.0
    %736 = vmatpush1.msra.mxu0 %v444
    %737 = vmatprep.subr.mxu0 0.0
    %738 = vmatpush1.msra.mxu0 %v447
    %739 = vmatprep.subr.mxu0 0.0
    %740 = vmatpush1.msra.mxu0 %v450
    %741 = vmatprep.subr.mxu0 0.0
    %742 = vmatpush1.msra.mxu0 %v453
    %743 = vmatprep.subr.mxu0 0.0
    %744 = vmatpush1.msra.mxu0 %v456
    %745 = vmatprep.subr.mxu0 0.0
    %746 = vmatpush1.msra.mxu0 %v459
    %747 = vmatprep.subr.mxu0 0.0
    %748 = vmatpush1.msra.mxu0 %v462
    %749 = vmatprep.subr.mxu0 0.0
    %750 = vmatpush1.msra.mxu0 0.0
    %751 = vmatprep.subr.mxu0 0.0
    %752 = vmatpush1.msra.mxu0 0.0
    %753 = vmatprep.subr.mxu0 0.0
    %754 = vmatpush1.msra.mxu0 0.0
    %755 = vmatprep.subr.mxu0 0.0
    %756 = vmatpush1.msra.mxu0 0.0
    %757 = vmatprep.subr.mxu0 0.0
    %758 = vmatpush1.msra.mxu0 0.0
    %759 = vmatprep.subr.mxu0 0.0
    %760 = vmatpush1.msra.mxu0 0.0
    %761 = vmatprep.subr.mxu0 0.0
    %762 = vmatpush1.msra.mxu0 0.0
    %763 = vmatprep.subr.mxu0 0.0
    %764 = vmatpush1.msra.mxu0 0.0
    %765 = vmatprep.subr.mxu0 0.0
    %766 = vmatpush1.msra.mxu0 0.0
    %767 = vmatprep.subr.mxu0 0.0
    %768 = vmatpush1.msra.mxu0 0.0
    %769 = vmatprep.subr.mxu0 0.0
    %770 = vmatpush1.msra.mxu0 0.0
    %771 = vmatprep.subr.mxu0 0.0
    %772 = vmatpush1.msra.mxu0 0.0
    %773 = vmatprep.subr.mxu0 0.0
    %774 = vmatpush1.msra.mxu0 0.0
    %775 = vmatprep.subr.mxu0 0.0
    %776 = vmatpush1.msra.mxu0 0.0
    %777 = vmatprep.subr.mxu0 0.0
    %778 = vmatpush1.msra.mxu0 0.0
    %779 = vmatprep.subr.mxu0 0.0
    %780 = vmatpush1.msra.mxu0 0.0
    %781 = vmatprep.mubr.f32.mxu0 0.0
    %782 = vmatmul.mubr.f32.gmra.mrb[0].mxu0 %v642
    %v783 = vpop.f32.mrb[0].mxu0
    %v784 = vadd.f32 %v477, %v783
    %v785 = vpop.f32.mrb[0].mxu0
    %786 = vdwg.mxu0
    %v788 = vrot.slane %v713, 6
    %v790 = vadd.f32 %v330, %v788
    %v791 = vxor.u32 %v790, 2147483648
    %v792 = vmul.f32 %v791, 1.442695
    %v793 = vpow.pop %v792
    %v794 = vadd.f32 %v793, 1.0
    %v795 = vrcp.pop %v794
    %v796 = vmul.f32 1.0, %v795
    %v798 = vrot.slane %v715, 6
    %v800 = vadd.f32 %v332, %v798
    %v801 = vxor.u32 %v800, 2147483648
    %v802 = vmul.f32 %v801, 1.442695
    %v803 = vpow.pop %v802
    %v804 = vadd.f32 %v803, 1.0
    %v805 = vrcp.pop %v804
    %v806 = vmul.f32 1.0, %v805
    %v808 = vrot.slane %v784, 6
    %v810 = vmul.f32 %v796, %v808
    %v811 = vadd.f32 %v407, %v810
    %v812 = vtanh.pop %v811
    %v813 = vsub.f32 1.0, %v806
    %v814 = vmul.f32 %v813, %v812
    %v816 = vrot.slane %v642, 6
    %v818 = vmul.f32 %v806, %v816
    %v819 = vadd.f32 %v814, %v818
    %s820 = scalar_lea.vmem [#allocation11], 2
    %821 = vst [vmem:[%s820 - $0x2] sm:$0xc] %v819
    %s822 = scalar_lea.vmem [#allocation10], 4
    %823 = vst [vmem:[%s822 - $0x4] sm:$0x30] %v190
    %v825 = vrot.slane %v819, 2
    %827 = vmatprep.subr.mxu0 %v416
    %828 = vmatpush1.msra.mxu0 %v415
    %829 = vmatprep.subr.mxu0 %v419
    %830 = vmatpush1.msra.mxu0 %v418
    %831 = vmatprep.subr.mxu0 %v422
    %832 = vmatpush1.msra.mxu0 %v421
    %833 = vmatprep.subr.mxu0 %v425
    %834 = vmatpush1.msra.mxu0 %v424
    %835 = vmatprep.subr.mxu0 %v428
    %836 = vmatpush1.msra.mxu0 %v427
    %837 = vmatprep.subr.mxu0 %v431
    %838 = vmatpush1.msra.mxu0 %v430
    %839 = vmatprep.subr.mxu0 %v434
    %840 = vmatpush1.msra.mxu0 %v433
    %841 = vmatprep.subr.mxu0 %v437
    %842 = vmatpush1.msra.mxu0 %v436
    %843 = vmatprep.subr.mxu0 %v440
    %844 = vmatpush1.msra.mxu0 %v439
    %845 = vmatprep.subr.mxu0 %v443
    %846 = vmatpush1.msra.mxu0 %v442
    %847 = vmatprep.subr.mxu0 %v446
    %848 = vmatpush1.msra.mxu0 %v445
    %849 = vmatprep.subr.mxu0 %v449
    %850 = vmatpush1.msra.mxu0 %v448
    %851 = vmatprep.subr.mxu0 %v452
    %852 = vmatpush1.msra.mxu0 %v451
    %853 = vmatprep.subr.mxu0 %v455
    %854 = vmatpush1.msra.mxu0 %v454
    %855 = vmatprep.subr.mxu0 %v458
    %856 = vmatpush1.msra.mxu0 %v457
    %857 = vmatprep.subr.mxu0 %v461
    %858 = vmatpush1.msra.mxu0 %v460
    %859 = vmatprep.subr.mxu0 0.0
    %860 = vmatpush1.msra.mxu0 0.0
    %861 = vmatprep.subr.mxu0 0.0
    %862 = vmatpush1.msra.mxu0 0.0
    %863 = vmatprep.subr.mxu0 0.0
    %864 = vmatpush1.msra.mxu0 0.0
    %865 = vmatprep.subr.mxu0 0.0
    %866 = vmatpush1.msra.mxu0 0.0
    %867 = vmatprep.subr.mxu0 0.0
    %868 = vmatpush1.msra.mxu0 0.0
    %869 = vmatprep.subr.mxu0 0.0
    %870 = vmatpush1.msra.mxu0 0.0
    %871 = vmatprep.subr.mxu0 0.0
    %872 = vmatpush1.msra.mxu0 0.0
    %873 = vmatprep.subr.mxu0 0.0
    %874 = vmatpush1.msra.mxu0 0.0
    %875 = vmatprep.subr.mxu0 0.0
    %876 = vmatpush1.msra.mxu0 0.0
    %877 = vmatprep.subr.mxu0 0.0
    %878 = vmatpush1.msra.mxu0 0.0
    %879 = vmatprep.subr.mxu0 0.0
    %880 = vmatpush1.msra.mxu0 0.0
    %881 = vmatprep.subr.mxu0 0.0
    %882 = vmatpush1.msra.mxu0 0.0
    %883 = vmatprep.subr.mxu0 0.0
    %884 = vmatpush1.msra.mxu0 0.0
    %885 = vmatprep.subr.mxu0 0.0
    %886 = vmatpush1.msra.mxu0 0.0
    %887 = vmatprep.subr.mxu0 0.0
    %888 = vmatpush1.msra.mxu0 0.0
    %889 = vmatprep.subr.mxu0 0.0
    %890 = vmatpush1.msra.mxu0 0.0
    %891 = vmatprep.mubr.f32.mxu0 0.0
    %892 = vmatmul.mubr.f32.gmra.mrb[0].mxu0 %v825
    %v893 = vpop.f32.mrb[0].mxu0
    %v894 = vadd.f32 %v469, %v893
    %v895 = vpop.f32.mrb[0].mxu0
    %v896 = vadd.f32 %v473, %v895
    %897 = vdwg.mxu0
    %898 = vmatprep.subr.mxu0 0.0
    %899 = vmatpush1.msra.mxu0 %v417
    %900 = vmatprep.subr.mxu0 0.0
    %901 = vmatpush1.msra.mxu0 %v420
    %902 = vmatprep.subr.mxu0 0.0
    %903 = vmatpush1.msra.mxu0 %v423
    %904 = vmatprep.subr.mxu0 0.0
    %905 = vmatpush1.msra.mxu0 %v426
    %906 = vmatprep.subr.mxu0 0.0
    %907 = vmatpush1.msra.mxu0 %v429
    %908 = vmatprep.subr.mxu0 0.0
    %909 = vmatpush1.msra.mxu0 %v432
    %910 = vmatprep.subr.mxu0 0.0
    %911 = vmatpush1.msra.mxu0 %v435
    %912 = vmatprep.subr.mxu0 0.0
    %913 = vmatpush1.msra.mxu0 %v438
    %914 = vmatprep.subr.mxu0 0.0
    %915 = vmatpush1.msra.mxu0 %v441
    %916 = vmatprep.subr.mxu0 0.0
    %917 = vmatpush1.msra.mxu0 %v444
    %918 = vmatprep.subr.mxu0 0.0
    %919 = vmatpush1.msra.mxu0 %v447
    %920 = vmatprep.subr.mxu0 0.0
    %921 = vmatpush1.msra.mxu0 %v450
    %922 = vmatprep.subr.mxu0 0.0
    %923 = vmatpush1.msra.mxu0 %v453
    %924 = vmatprep.subr.mxu0 0.0
    %925 = vmatpush1.msra.mxu0 %v456
    %926 = vmatprep.subr.mxu0 0.0
    %927 = vmatpush1.msra.mxu0 %v459
    %928 = vmatprep.subr.mxu0 0.0
    %929 = vmatpush1.msra.mxu0 %v462
    %930 = vmatprep.subr.mxu0 0.0
    %931 = vmatpush1.msra.mxu0 0.0
    %932 = vmatprep.subr.mxu0 0.0
    %933 = vmatpush1.msra.mxu0 0.0
    %934 = vmatprep.subr.mxu0 0.0
    %935 = vmatpush1.msra.mxu0 0.0
    %936 = vmatprep.subr.mxu0 0.0
    %937 = vmatpush1.msra.mxu0 0.0
    %938 = vmatprep.subr.mxu0 0.0
    %939 = vmatpush1.msra.mxu0 0.0
    %940 = vmatprep.subr.mxu0 0.0
    %941 = vmatpush1.msra.mxu0 0.0
    %942 = vmatprep.subr.mxu0 0.0
    %943 = vmatpush1.msra.mxu0 0.0
    %944 = vmatprep.subr.mxu0 0.0
    %945 = vmatpush1.msra.mxu0 0.0
    %946 = vmatprep.subr.mxu0 0.0
    %947 = vmatpush1.msra.mxu0 0.0
    %948 = vmatprep.subr.mxu0 0.0
    %949 = vmatpush1.msra.mxu0 0.0
    %950 = vmatprep.subr.mxu0 0.0
    %951 = vmatpush1.msra.mxu0 0.0
    %952 = vmatprep.subr.mxu0 0.0
    %953 = vmatpush1.msra.mxu0 0.0
    %954 = vmatprep.subr.mxu0 0.0
    %955 = vmatpush1.msra.mxu0 0.0
    %956 = vmatprep.subr.mxu0 0.0
    %957 = vmatpush1.msra.mxu0 0.0
    %958 = vmatprep.subr.mxu0 0.0
    %959 = vmatpush1.msra.mxu0 0.0
    %960 = vmatprep.subr.mxu0 0.0
    %961 = vmatpush1.msra.mxu0 0.0
    %962 = vmatprep.mubr.f32.mxu0 0.0
    %963 = vmatmul.mubr.f32.gmra.mrb[0].mxu0 %v825
    %v964 = vpop.f32.mrb[0].mxu0
    %v965 = vadd.f32 %v477, %v964
    %v966 = vpop.f32.mrb[0].mxu0
    %967 = vdwg.mxu0
    %v969 = vrot.slane %v894, 4
    %v971 = vadd.f32 %v330, %v969
    %v972 = vxor.u32 %v971, 2147483648
    %v973 = vmul.f32 %v972, 1.442695
    %v974 = vpow.pop %v973
    %v975 = vadd.f32 %v974, 1.0
    %v976 = vrcp.pop %v975
    %v977 = vmul.f32 1.0, %v976
    %v979 = vrot.slane %v896, 4
    %v981 = vadd.f32 %v332, %v979
    %v982 = vxor.u32 %v981, 2147483648
    %v983 = vmul.f32 %v982, 1.442695
    %v984 = vpow.pop %v983
    %v985 = vadd.f32 %v984, 1.0
    %v986 = vrcp.pop %v985
    %v987 = vmul.f32 1.0, %v986
    %v989 = vrot.slane %v965, 4
    %v991 = vmul.f32 %v977, %v989
    %v992 = vadd.f32 %v407, %v991
    %v993 = vtanh.pop %v992
    %v994 = vsub.f32 1.0, %v987
    %v995 = vmul.f32 %v994, %v993
    %v996 = vrot.slane %v819, 6
    %v998 = vmul.f32 %v987, %v996
    %v999 = vadd.f32 %v995, %v998
    %s1000 = scalar_lea.vmem [#allocation11], 4
    %1001 = vst [vmem:[%s1000 - $0x4] sm:$0x30] %v999
    %s1002 = scalar_lea.vmem [#allocation10], 6
    %1003 = vst [vmem:[%s1002 - $0x6] sm:$0xc0] %v190
    %v1005 = vrot.slane %v999, 4
    %1007 = vmatprep.subr.mxu0 %v416
    %1008 = vmatpush1.msra.mxu0 %v415
    %1009 = vmatprep.subr.mxu0 %v419
    %1010 = vmatpush1.msra.mxu0 %v418
    %1011 = vmatprep.subr.mxu0 %v422
    %1012 = vmatpush1.msra.mxu0 %v421
    %1013 = vmatprep.subr.mxu0 %v425
    %1014 = vmatpush1.msra.mxu0 %v424
    %1015 = vmatprep.subr.mxu0 %v428
    %1016 = vmatpush1.msra.mxu0 %v427
    %1017 = vmatprep.subr.mxu0 %v431
    %1018 = vmatpush1.msra.mxu0 %v430
    %1019 = vmatprep.subr.mxu0 %v434
    %1020 = vmatpush1.msra.mxu0 %v433
    %1021 = vmatprep.subr.mxu0 %v437
    %1022 = vmatpush1.msra.mxu0 %v436
    %1023 = vmatprep.subr.mxu0 %v440
    %1024 = vmatpush1.msra.mxu0 %v439
    %1025 = vmatprep.subr.mxu0 %v443
    %1026 = vmatpush1.msra.mxu0 %v442
    %1027 = vmatprep.subr.mxu0 %v446
    %1028 = vmatpush1.msra.mxu0 %v445
    %1029 = vmatprep.subr.mxu0 %v449
    %1030 = vmatpush1.msra.mxu0 %v448
    %1031 = vmatprep.subr.mxu0 %v452
    %1032 = vmatpush1.msra.mxu0 %v451
    %1033 = vmatprep.subr.mxu0 %v455
    %1034 = vmatpush1.msra.mxu0 %v454
    %1035 = vmatprep.subr.mxu0 %v458
    %1036 = vmatpush1.msra.mxu0 %v457
    %1037 = vmatprep.subr.mxu0 %v461
    %1038 = vmatpush1.msra.mxu0 %v460
    %1039 = vmatprep.subr.mxu0 0.0
    %1040 = vmatpush1.msra.mxu0 0.0
    %1041 = vmatprep.subr.mxu0 0.0
    %1042 = vmatpush1.msra.mxu0 0.0
    %1043 = vmatprep.subr.mxu0 0.0
    %1044 = vmatpush1.msra.mxu0 0.0
    %1045 = vmatprep.subr.mxu0 0.0
    %1046 = vmatpush1.msra.mxu0 0.0
    %1047 = vmatprep.subr.mxu0 0.0
    %1048 = vmatpush1.msra.mxu0 0.0
    %1049 = vmatprep.subr.mxu0 0.0
    %1050 = vmatpush1.msra.mxu0 0.0
    %1051 = vmatprep.subr.mxu0 0.0
    %1052 = vmatpush1.msra.mxu0 0.0
    %1053 = vmatprep.subr.mxu0 0.0
    %1054 = vmatpush1.msra.mxu0 0.0
    %1055 = vmatprep.subr.mxu0 0.0
    %1056 = vmatpush1.msra.mxu0 0.0
    %1057 = vmatprep.subr.mxu0 0.0
    %1058 = vmatpush1.msra.mxu0 0.0
    %1059 = vmatprep.subr.mxu0 0.0
    %1060 = vmatpush1.msra.mxu0 0.0
    %1061 = vmatprep.subr.mxu0 0.0
    %1062 = vmatpush1.msra.mxu0 0.0
    %1063 = vmatprep.subr.mxu0 0.0
    %1064 = vmatpush1.msra.mxu0 0.0
    %1065 = vmatprep.subr.mxu0 0.0
    %1066 = vmatpush1.msra.mxu0 0.0
    %1067 = vmatprep.subr.mxu0 0.0
    %1068 = vmatpush1.msra.mxu0 0.0
    %1069 = vmatprep.subr.mxu0 0.0
    %1070 = vmatpush1.msra.mxu0 0.0
    %1071 = vmatprep.mubr.f32.mxu0 0.0
    %1072 = vmatmul.mubr.f32.gmra.mrb[0].mxu0 %v1005
    %v1073 = vpop.f32.mrb[0].mxu0
    %v1074 = vadd.f32 %v469, %v1073
    %v1075 = vpop.f32.mrb[0].mxu0
    %v1076 = vadd.f32 %v473, %v1075
    %1077 = vdwg.mxu0
    %1078 = vmatprep.subr.mxu0 0.0
    %1079 = vmatpush1.msra.mxu0 %v417
    %1080 = vmatprep.subr.mxu0 0.0
    %1081 = vmatpush1.msra.mxu0 %v420
    %1082 = vmatprep.subr.mxu0 0.0
    %1083 = vmatpush1.msra.mxu0 %v423
    %1084 = vmatprep.subr.mxu0 0.0
    %1085 = vmatpush1.msra.mxu0 %v426
    %1086 = vmatprep.subr.mxu0 0.0
    %1087 = vmatpush1.msra.mxu0 %v429
    %1088 = vmatprep.subr.mxu0 0.0
    %1089 = vmatpush1.msra.mxu0 %v432
    %1090 = vmatprep.subr.mxu0 0.0
    %1091 = vmatpush1.msra.mxu0 %v435
    %1092 = vmatprep.subr.mxu0 0.0
    %1093 = vmatpush1.msra.mxu0 %v438
    %1094 = vmatprep.subr.mxu0 0.0
    %1095 = vmatpush1.msra.mxu0 %v441
    %1096 = vmatprep.subr.mxu0 0.0
    %1097 = vmatpush1.msra.mxu0 %v444
    %1098 = vmatprep.subr.mxu0 0.0
    %1099 = vmatpush1.msra.mxu0 %v447
    %1100 = vmatprep.subr.mxu0 0.0
    %1101 = vmatpush1.msra.mxu0 %v450
    %1102 = vmatprep.subr.mxu0 0.0
    %1103 = vmatpush1.msra.mxu0 %v453
    %1104 = vmatprep.subr.mxu0 0.0
    %1105 = vmatpush1.msra.mxu0 %v456
    %1106 = vmatprep.subr.mxu0 0.0
    %1107 = vmatpush1.msra.mxu0 %v459
    %1108 = vmatprep.subr.mxu0 0.0
    %1109 = vmatpush1.msra.mxu0 %v462
    %1110 = vmatprep.subr.mxu0 0.0
    %1111 = vmatpush1.msra.mxu0 0.0
    %1112 = vmatprep.subr.mxu0 0.0
    %1113 = vmatpush1.msra.mxu0 0.0
    %1114 = vmatprep.subr.mxu0 0.0
    %1115 = vmatpush1.msra.mxu0 0.0
    %1116 = vmatprep.subr.mxu0 0.0
    %1117 = vmatpush1.msra.mxu0 0.0
    %1118 = vmatprep.subr.mxu0 0.0
    %1119 = vmatpush1.msra.mxu0 0.0
    %1120 = vmatprep.subr.mxu0 0.0
    %1121 = vmatpush1.msra.mxu0 0.0
    %1122 = vmatprep.subr.mxu0 0.0
    %1123 = vmatpush1.msra.mxu0 0.0
    %1124 = vmatprep.subr.mxu0 0.0
    %1125 = vmatpush1.msra.mxu0 0.0
    %1126 = vmatprep.subr.mxu0 0.0
    %1127 = vmatpush1.msra.mxu0 0.0
    %1128 = vmatprep.subr.mxu0 0.0
    %1129 = vmatpush1.msra.mxu0 0.0
    %1130 = vmatprep.subr.mxu0 0.0
    %1131 = vmatpush1.msra.mxu0 0.0
    %1132 = vmatprep.subr.mxu0 0.0
    %1133 = vmatpush1.msra.mxu0 0.0
    %1134 = vmatprep.subr.mxu0 0.0
    %1135 = vmatpush1.msra.mxu0 0.0
    %1136 = vmatprep.subr.mxu0 0.0
    %1137 = vmatpush1.msra.mxu0 0.0
    %1138 = vmatprep.subr.mxu0 0.0
    %1139 = vmatpush1.msra.mxu0 0.0
    %1140 = vmatprep.subr.mxu0 0.0
    %1141 = vmatpush1.msra.mxu0 0.0
    %1142 = vmatprep.mubr.f32.mxu0 0.0
    %1143 = vmatmul.mubr.f32.gmra.mrb[0].mxu0 %v1005
    %v1144 = vpop.f32.mrb[0].mxu0
    %v1145 = vadd.f32 %v477, %v1144
    %v1146 = vpop.f32.mrb[0].mxu0
    %1147 = vdwg.mxu0
    %v1149 = vrot.slane %v1074, 2
    %v1151 = vadd.f32 %v330, %v1149
    %v1152 = vxor.u32 %v1151, 2147483648
    %v1153 = vmul.f32 %v1152, 1.442695
    %v1154 = vpow.pop %v1153
    %v1155 = vadd.f32 %v1154, 1.0
    %v1156 = vrcp.pop %v1155
    %v1157 = vmul.f32 1.0, %v1156
    %v1159 = vrot.slane %v1076, 2
    %v1161 = vadd.f32 %v332, %v1159
    %v1162 = vxor.u32 %v1161, 2147483648
    %v1163 = vmul.f32 %v1162, 1.442695
    %v1164 = vpow.pop %v1163
    %v1165 = vadd.f32 %v1164, 1.0
    %v1166 = vrcp.pop %v1165
    %v1167 = vmul.f32 1.0, %v1166
    %v1169 = vrot.slane %v1145, 2
    %v1171 = vmul.f32 %v1157, %v1169
    %v1172 = vadd.f32 %v407, %v1171
    %v1173 = vtanh.pop %v1172
    %v1174 = vsub.f32 1.0, %v1167
    %v1175 = vmul.f32 %v1174, %v1173
    %v1176 = vrot.slane %v999, 6
    %v1178 = vmul.f32 %v1167, %v1176
    %v1179 = vadd.f32 %v1175, %v1178
    %s1180 = scalar_lea.vmem [#allocation11], 6
    %1181 = vst [vmem:[%s1180 - $0x6] sm:$0xc0] %v1179
    %s1182 = scalar_lea.vmem [#allocation10], 8
    %1183 = vst [vmem:[%s1182] sm:$0x3] %v195
    %v1185 = vrot.slane %v1179, 6
    %1187 = vmatprep.subr.mxu0 %v416
    %1188 = vmatpush1.msra.mxu0 %v415
    %1189 = vmatprep.subr.mxu0 %v419
    %1190 = vmatpush1.msra.mxu0 %v418
    %1191 = vmatprep.subr.mxu0 %v422
    %1192 = vmatpush1.msra.mxu0 %v421
    %1193 = vmatprep.subr.mxu0 %v425
    %1194 = vmatpush1.msra.mxu0 %v424
    %1195 = vmatprep.subr.mxu0 %v428
    %1196 = vmatpush1.msra.mxu0 %v427
    %1197 = vmatprep.subr.mxu0 %v431
    %1198 = vmatpush1.msra.mxu0 %v430
    %1199 = vmatprep.subr.mxu0 %v434
    %1200 = vmatpush1.msra.mxu0 %v433
    %1201 = vmatprep.subr.mxu0 %v437
    %1202 = vmatpush1.msra.mxu0 %v436
    %1203 = vmatprep.subr.mxu0 %v440
    %1204 = vmatpush1.msra.mxu0 %v439
    %1205 = vmatprep.subr.mxu0 %v443
    %1206 = vmatpush1.msra.mxu0 %v442
    %1207 = vmatprep.subr.mxu0 %v446
    %1208 = vmatpush1.msra.mxu0 %v445
    %1209 = vmatprep.subr.mxu0 %v449
    %1210 = vmatpush1.msra.mxu0 %v448
    %1211 = vmatprep.subr.mxu0 %v452
    %1212 = vmatpush1.msra.mxu0 %v451
    %1213 = vmatprep.subr.mxu0 %v455
    %1214 = vmatpush1.msra.mxu0 %v454
    %1215 = vmatprep.subr.mxu0 %v458
    %1216 = vmatpush1.msra.mxu0 %v457
    %1217 = vmatprep.subr.mxu0 %v461
    %1218 = vmatpush1.msra.mxu0 %v460
    %1219 = vmatprep.subr.mxu0 0.0
    %1220 = vmatpush1.msra.mxu0 0.0
    %1221 = vmatprep.subr.mxu0 0.0
    %1222 = vmatpush1.msra.mxu0 0.0
    %1223 = vmatprep.subr.mxu0 0.0
    %1224 = vmatpush1.msra.mxu0 0.0
    %1225 = vmatprep.subr.mxu0 0.0
    %1226 = vmatpush1.msra.mxu0 0.0
    %1227 = vmatprep.subr.mxu0 0.0
    %1228 = vmatpush1.msra.mxu0 0.0
    %1229 = vmatprep.subr.mxu0 0.0
    %1230 = vmatpush1.msra.mxu0 0.0
    %1231 = vmatprep.subr.mxu0 0.0
    %1232 = vmatpush1.msra.mxu0 0.0
    %1233 = vmatprep.subr.mxu0 0.0
    %1234 = vmatpush1.msra.mxu0 0.0
    %1235 = vmatprep.subr.mxu0 0.0
    %1236 = vmatpush1.msra.mxu0 0.0
    %1237 = vmatprep.subr.mxu0 0.0
    %1238 = vmatpush1.msra.mxu0 0.0
    %1239 = vmatprep.subr.mxu0 0.0
    %1240 = vmatpush1.msra.mxu0 0.0
    %1241 = vmatprep.subr.mxu0 0.0
    %1242 = vmatpush1.msra.mxu0 0.0
    %1243 = vmatprep.subr.mxu0 0.0
    %1244 = vmatpush1.msra.mxu0 0.0
    %1245 = vmatprep.subr.mxu0 0.0
    %1246 = vmatpush1.msra.mxu0 0.0
    %1247 = vmatprep.subr.mxu0 0.0
    %1248 = vmatpush1.msra.mxu0 0.0
    %1249 = vmatprep.subr.mxu0 0.0
    %1250 = vmatpush1.msra.mxu0 0.0
    %1251 = vmatprep.mubr.f32.mxu0 0.0
    %1252 = vmatmul.mubr.f32.gmra.mrb[0].mxu0 %v1185
    %v1253 = vpop.f32.mrb[0].mxu0
    %v1254 = vadd.f32 %v469, %v1253
    %v1255 = vpop.f32.mrb[0].mxu0
    %v1256 = vadd.f32 %v473, %v1255
    %1257 = vdwg.mxu0
    %1258 = vmatprep.subr.mxu0 0.0
    %1259 = vmatpush1.msra.mxu0 %v417
    %1260 = vmatprep.subr.mxu0 0.0
    %1261 = vmatpush1.msra.mxu0 %v420
    %1262 = vmatprep.subr.mxu0 0.0
    %1263 = vmatpush1.msra.mxu0 %v423
    %1264 = vmatprep.subr.mxu0 0.0
    %1265 = vmatpush1.msra.mxu0 %v426
    %1266 = vmatprep.subr.mxu0 0.0
    %1267 = vmatpush1.msra.mxu0 %v429
    %1268 = vmatprep.subr.mxu0 0.0
    %1269 = vmatpush1.msra.mxu0 %v432
    %1270 = vmatprep.subr.mxu0 0.0
    %1271 = vmatpush1.msra.mxu0 %v435
    %1272 = vmatprep.subr.mxu0 0.0
    %1273 = vmatpush1.msra.mxu0 %v438
    %1274 = vmatprep.subr.mxu0 0.0
    %1275 = vmatpush1.msra.mxu0 %v441
    %1276 = vmatprep.subr.mxu0 0.0
    %1277 = vmatpush1.msra.mxu0 %v444
    %1278 = vmatprep.subr.mxu0 0.0
    %1279 = vmatpush1.msra.mxu0 %v447
    %1280 = vmatprep.subr.mxu0 0.0
    %1281 = vmatpush1.msra.mxu0 %v450
    %1282 = vmatprep.subr.mxu0 0.0
    %1283 = vmatpush1.msra.mxu0 %v453
    %1284 = vmatprep.subr.mxu0 0.0
    %1285 = vmatpush1.msra.mxu0 %v456
    %1286 = vmatprep.subr.mxu0 0.0
    %1287 = vmatpush1.msra.mxu0 %v459
    %1288 = vmatprep.subr.mxu0 0.0
    %1289 = vmatpush1.msra.mxu0 %v462
    %1290 = vmatprep.subr.mxu0 0.0
    %1291 = vmatpush1.msra.mxu0 0.0
    %1292 = vmatprep.subr.mxu0 0.0
    %1293 = vmatpush1.msra.mxu0 0.0
    %1294 = vmatprep.subr.mxu0 0.0
    %1295 = vmatpush1.msra.mxu0 0.0
    %1296 = vmatprep.subr.mxu0 0.0
    %1297 = vmatpush1.msra.mxu0 0.0
    %1298 = vmatprep.subr.mxu0 0.0
    %1299 = vmatpush1.msra.mxu0 0.0
    %1300 = vmatprep.subr.mxu0 0.0
    %1301 = vmatpush1.msra.mxu0 0.0
    %1302 = vmatprep.subr.mxu0 0.0
    %1303 = vmatpush1.msra.mxu0 0.0
    %1304 = vmatprep.subr.mxu0 0.0
    %1305 = vmatpush1.msra.mxu0 0.0
    %1306 = vmatprep.subr.mxu0 0.0
    %1307 = vmatpush1.msra.mxu0 0.0
    %1308 = vmatprep.subr.mxu0 0.0
    %1309 = vmatpush1.msra.mxu0 0.0
    %1310 = vmatprep.subr.mxu0 0.0
    %1311 = vmatpush1.msra.mxu0 0.0
    %1312 = vmatprep.subr.mxu0 0.0
    %1313 = vmatpush1.msra.mxu0 0.0
    %1314 = vmatprep.subr.mxu0 0.0
    %1315 = vmatpush1.msra.mxu0 0.0
    %1316 = vmatprep.subr.mxu0 0.0
    %1317 = vmatpush1.msra.mxu0 0.0
    %1318 = vmatprep.subr.mxu0 0.0
    %1319 = vmatpush1.msra.mxu0 0.0
    %1320 = vmatprep.subr.mxu0 0.0
    %1321 = vmatpush1.msra.mxu0 0.0
    %1322 = vmatprep.mubr.f32.mxu0 0.0
    %1323 = vmatmul.mubr.f32.gmra.mrb[0].mxu0 %v1185
    %v1324 = vpop.f32.mrb[0].mxu0
    %v1325 = vadd.f32 %v477, %v1324
    %v1326 = vpop.f32.mrb[0].mxu0
    %1327 = vdwg.mxu0
    %v1328 = vadd.f32 %v336, %v1254
    %v1329 = vxor.u32 %v1328, 2147483648
    %v1330 = vmul.f32 %v1329, 1.442695
    %v1331 = vpow.pop %v1330
    %v1332 = vadd.f32 %v1331, 1.0
    %v1333 = vrcp.pop %v1332
    %v1334 = vmul.f32 1.0, %v1333
    %v1335 = vadd.f32 %v338, %v1256
    %v1336 = vxor.u32 %v1335, 2147483648
    %v1337 = vmul.f32 %v1336, 1.442695
    %v1338 = vpow.pop %v1337
    %v1339 = vadd.f32 %v1338, 1.0
    %v1340 = vrcp.pop %v1339
    %v1341 = vmul.f32 1.0, %v1340
    %v1342 = vmul.f32 %v1334, %v1325
    %v1343 = vadd.f32 %v412, %v1342
    %v1344 = vtanh.pop %v1343
    %v1345 = vsub.f32 1.0, %v1341
    %v1346 = vmul.f32 %v1345, %v1344
    %v1347 = vmul.f32 %v1341, %v1185
    %v1348 = vadd.f32 %v1346, %v1347
    %s1349 = scalar_lea.vmem [#allocation11], 8
    %1350 = vst [vmem:[%s1349] sm:$0x3] %v1348
    %s1351 = scalar_lea.vmem [#allocation10], 10
    %1352 = vst [vmem:[%s1351 - $0x2] sm:$0xc] %v195
    %1353 = vmatprep.subr.mxu0 %v416
    %1354 = vmatpush1.msra.mxu0 %v415
    %1355 = vmatprep.subr.mxu0 %v419
    %1356 = vmatpush1.msra.mxu0 %v418
    %1357 = vmatprep.subr.mxu0 %v422
    %1358 = vmatpush1.msra.mxu0 %v421
    %1359 = vmatprep.subr.mxu0 %v425
    %1360 = vmatpush1.msra.mxu0 %v424
    %1361 = vmatprep.subr.mxu0 %v428
    %1362 = vmatpush1.msra.mxu0 %v427
    %1363 = vmatprep.subr.mxu0 %v431
    %1364 = vmatpush1.msra.mxu0 %v430
    %1365 = vmatprep.subr.mxu0 %v434
    %1366 = vmatpush1.msra.mxu0 %v433
    %1367 = vmatprep.subr.mxu0 %v437
    %1368 = vmatpush1.msra.mxu0 %v436
    %1369 = vmatprep.subr.mxu0 %v440
    %1370 = vmatpush1.msra.mxu0 %v439
    %1371 = vmatprep.subr.mxu0 %v443
    %1372 = vmatpush1.msra.mxu0 %v442
    %1373 = vmatprep.subr.mxu0 %v446
    %1374 = vmatpush1.msra.mxu0 %v445
    %1375 = vmatprep.subr.mxu0 %v449
    %1376 = vmatpush1.msra.mxu0 %v448
    %1377 = vmatprep.subr.mxu0 %v452
    %1378 = vmatpush1.msra.mxu0 %v451
    %1379 = vmatprep.subr.mxu0 %v455
    %1380 = vmatpush1.msra.mxu0 %v454
    %1381 = vmatprep.subr.mxu0 %v458
    %1382 = vmatpush1.msra.mxu0 %v457
    %1383 = vmatprep.subr.mxu0 %v461
    %1384 = vmatpush1.msra.mxu0 %v460
    %1385 = vmatprep.subr.mxu0 0.0
    %1386 = vmatpush1.msra.mxu0 0.0
    %1387 = vmatprep.subr.mxu0 0.0
    %1388 = vmatpush1.msra.mxu0 0.0
    %1389 = vmatprep.subr.mxu0 0.0
    %1390 = vmatpush1.msra.mxu0 0.0
    %1391 = vmatprep.subr.mxu0 0.0
    %1392 = vmatpush1.msra.mxu0 0.0
    %1393 = vmatprep.subr.mxu0 0.0
    %1394 = vmatpush1.msra.mxu0 0.0
    %1395 = vmatprep.subr.mxu0 0.0
    %1396 = vmatpush1.msra.mxu0 0.0
    %1397 = vmatprep.subr.mxu0 0.0
    %1398 = vmatpush1.msra.mxu0 0.0
    %1399 = vmatprep.subr.mxu0 0.0
    %1400 = vmatpush1.msra.mxu0 0.0
    %1401 = vmatprep.subr.mxu0 0.0
    %1402 = vmatpush1.msra.mxu0 0.0
    %1403 = vmatprep.subr.mxu0 0.0
    %1404 = vmatpush1.msra.mxu0 0.0
    %1405 = vmatprep.subr.mxu0 0.0
    %1406 = vmatpush1.msra.mxu0 0.0
    %1407 = vmatprep.subr.mxu0 0.0
    %1408 = vmatpush1.msra.mxu0 0.0
    %1409 = vmatprep.subr.mxu0 0.0
    %1410 = vmatpush1.msra.mxu0 0.0
    %1411 = vmatprep.subr.mxu0 0.0
    %1412 = vmatpush1.msra.mxu0 0.0
    %1413 = vmatprep.subr.mxu0 0.0
    %1414 = vmatpush1.msra.mxu0 0.0
    %1415 = vmatprep.subr.mxu0 0.0
    %1416 = vmatpush1.msra.mxu0 0.0
    %1417 = vmatprep.mubr.f32.mxu0 0.0
    %1418 = vmatmul.mubr.f32.gmra.mrb[0].mxu0 %v1348
    %v1419 = vpop.f32.mrb[0].mxu0
    %v1420 = vadd.f32 %v469, %v1419
    %v1421 = vpop.f32.mrb[0].mxu0
    %v1422 = vadd.f32 %v473, %v1421
    %1423 = vdwg.mxu0
    %1424 = vmatprep.subr.mxu0 0.0
    %1425 = vmatpush1.msra.mxu0 %v417
    %1426 = vmatprep.subr.mxu0 0.0
    %1427 = vmatpush1.msra.mxu0 %v420
    %1428 = vmatprep.subr.mxu0 0.0
    %1429 = vmatpush1.msra.mxu0 %v423
    %1430 = vmatprep.subr.mxu0 0.0
    %1431 = vmatpush1.msra.mxu0 %v426
    %1432 = vmatprep.subr.mxu0 0.0
    %1433 = vmatpush1.msra.mxu0 %v429
    %1434 = vmatprep.subr.mxu0 0.0
    %1435 = vmatpush1.msra.mxu0 %v432
    %1436 = vmatprep.subr.mxu0 0.0
    %1437 = vmatpush1.msra.mxu0 %v435
    %1438 = vmatprep.subr.mxu0 0.0
    %1439 = vmatpush1.msra.mxu0 %v438
    %1440 = vmatprep.subr.mxu0 0.0
    %1441 = vmatpush1.msra.mxu0 %v441
    %1442 = vmatprep.subr.mxu0 0.0
    %1443 = vmatpush1.msra.mxu0 %v444
    %1444 = vmatprep.subr.mxu0 0.0
    %1445 = vmatpush1.msra.mxu0 %v447
    %1446 = vmatprep.subr.mxu0 0.0
    %1447 = vmatpush1.msra.mxu0 %v450
    %1448 = vmatprep.subr.mxu0 0.0
    %1449 = vmatpush1.msra.mxu0 %v453
    %1450 = vmatprep.subr.mxu0 0.0
    %1451 = vmatpush1.msra.mxu0 %v456
    %1452 = vmatprep.subr.mxu0 0.0
    %1453 = vmatpush1.msra.mxu0 %v459
    %1454 = vmatprep.subr.mxu0 0.0
    %1455 = vmatpush1.msra.mxu0 %v462
    %1456 = vmatprep.subr.mxu0 0.0
    %1457 = vmatpush1.msra.mxu0 0.0
    %1458 = vmatprep.subr.mxu0 0.0
    %1459 = vmatpush1.msra.mxu0 0.0
    %1460 = vmatprep.subr.mxu0 0.0
    %1461 = vmatpush1.msra.mxu0 0.0
    %1462 = vmatprep.subr.mxu0 0.0
    %1463 = vmatpush1.msra.mxu0 0.0
    %1464 = vmatprep.subr.mxu0 0.0
    %1465 = vmatpush1.msra.mxu0 0.0
    %1466 = vmatprep.subr.mxu0 0.0
    %1467 = vmatpush1.msra.mxu0 0.0
    %1468 = vmatprep.subr.mxu0 0.0
    %1469 = vmatpush1.msra.mxu0 0.0
    %1470 = vmatprep.subr.mxu0 0.0
    %1471 = vmatpush1.msra.mxu0 0.0
    %1472 = vmatprep.subr.mxu0 0.0
    %1473 = vmatpush1.msra.mxu0 0.0
    %1474 = vmatprep.subr.mxu0 0.0
    %1475 = vmatpush1.msra.mxu0 0.0
    %1476 = vmatprep.subr.mxu0 0.0
    %1477 = vmatpush1.msra.mxu0 0.0
    %1478 = vmatprep.subr.mxu0 0.0
    %1479 = vmatpush1.msra.mxu0 0.0
    %1480 = vmatprep.subr.mxu0 0.0
    %1481 = vmatpush1.msra.mxu0 0.0
    %1482 = vmatprep.subr.mxu0 0.0
    %1483 = vmatpush1.msra.mxu0 0.0
    %1484 = vmatprep.subr.mxu0 0.0
    %1485 = vmatpush1.msra.mxu0 0.0
    %1486 = vmatprep.subr.mxu0 0.0
    %1487 = vmatpush1.msra.mxu0 0.0
    %1488 = vmatprep.mubr.f32.mxu0 0.0
    %1489 = vmatmul.mubr.f32.gmra.mrb[0].mxu0 %v1348
    %v1490 = vpop.f32.mrb[0].mxu0
    %v1491 = vadd.f32 %v477, %v1490
    %v1492 = vpop.f32.mrb[0].mxu0
    %1493 = vdwg.mxu0
    %v1495 = vrot.slane %v1420, 6
    %v1497 = vadd.f32 %v336, %v1495
    %v1498 = vxor.u32 %v1497, 2147483648
    %v1499 = vmul.f32 %v1498, 1.442695
    %v1500 = vpow.pop %v1499
    %v1501 = vadd.f32 %v1500, 1.0
    %v1502 = vrcp.pop %v1501
    %v1503 = vmul.f32 1.0, %v1502
    %v1505 = vrot.slane %v1422, 6
    %v1507 = vadd.f32 %v338, %v1505
    %v1508 = vxor.u32 %v1507, 2147483648
    %v1509 = vmul.f32 %v1508, 1.442695
    %v1510 = vpow.pop %v1509
    %v1511 = vadd.f32 %v1510, 1.0
    %v1512 = vrcp.pop %v1511
    %v1513 = vmul.f32 1.0, %v1512
    %v1515 = vrot.slane %v1491, 6
    %v1517 = vmul.f32 %v1503, %v1515
    %v1518 = vadd.f32 %v412, %v1517
    %v1519 = vtanh.pop %v1518
    %v1520 = vsub.f32 1.0, %v1513
    %v1521 = vmul.f32 %v1520, %v1519
    %v1523 = vrot.slane %v1348, 6
    %v1525 = vmul.f32 %v1513, %v1523
    %v1526 = vadd.f32 %v1521, %v1525
    %s1527 = scalar_lea.vmem [#allocation11], 10
    %1528 = vst [vmem:[%s1527 - $0x2] sm:$0xc] %v1526
    %s1529 = scalar_lea.vmem [#allocation10], 12
    %1530 = vst [vmem:[%s1529 - $0x4] sm:$0x30] %v195
    %v1532 = vrot.slane %v1526, 2
    %1534 = vmatprep.subr.mxu0 %v416
    %1535 = vmatpush1.msra.mxu0 %v415
    %1536 = vmatprep.subr.mxu0 %v419
    %1537 = vmatpush1.msra.mxu0 %v418
    %1538 = vmatprep.subr.mxu0 %v422
    %1539 = vmatpush1.msra.mxu0 %v421
    %1540 = vmatprep.subr.mxu0 %v425
    %1541 = vmatpush1.msra.mxu0 %v424
    %1542 = vmatprep.subr.mxu0 %v428
    %1543 = vmatpush1.msra.mxu0 %v427
    %1544 = vmatprep.subr.mxu0 %v431
    %1545 = vmatpush1.msra.mxu0 %v430
    %1546 = vmatprep.subr.mxu0 %v434
    %1547 = vmatpush1.msra.mxu0 %v433
    %1548 = vmatprep.subr.mxu0 %v437
    %1549 = vmatpush1.msra.mxu0 %v436
    %1550 = vmatprep.subr.mxu0 %v440
    %1551 = vmatpush1.msra.mxu0 %v439
    %1552 = vmatprep.subr.mxu0 %v443
    %1553 = vmatpush1.msra.mxu0 %v442
    %1554 = vmatprep.subr.mxu0 %v446
    %1555 = vmatpush1.msra.mxu0 %v445
    %1556 = vmatprep.subr.mxu0 %v449
    %1557 = vmatpush1.msra.mxu0 %v448
    %1558 = vmatprep.subr.mxu0 %v452
    %1559 = vmatpush1.msra.mxu0 %v451
    %1560 = vmatprep.subr.mxu0 %v455
    %1561 = vmatpush1.msra.mxu0 %v454
    %1562 = vmatprep.subr.mxu0 %v458
    %1563 = vmatpush1.msra.mxu0 %v457
    %1564 = vmatprep.subr.mxu0 %v461
    %1565 = vmatpush1.msra.mxu0 %v460
    %1566 = vmatprep.subr.mxu0 0.0
    %1567 = vmatpush1.msra.mxu0 0.0
    %1568 = vmatprep.subr.mxu0 0.0
    %1569 = vmatpush1.msra.mxu0 0.0
    %1570 = vmatprep.subr.mxu0 0.0
    %1571 = vmatpush1.msra.mxu0 0.0
    %1572 = vmatprep.subr.mxu0 0.0
    %1573 = vmatpush1.msra.mxu0 0.0
    %1574 = vmatprep.subr.mxu0 0.0
    %1575 = vmatpush1.msra.mxu0 0.0
    %1576 = vmatprep.subr.mxu0 0.0
    %1577 = vmatpush1.msra.mxu0 0.0
    %1578 = vmatprep.subr.mxu0 0.0
    %1579 = vmatpush1.msra.mxu0 0.0
    %1580 = vmatprep.subr.mxu0 0.0
    %1581 = vmatpush1.msra.mxu0 0.0
    %1582 = vmatprep.subr.mxu0 0.0
    %1583 = vmatpush1.msra.mxu0 0.0
    %1584 = vmatprep.subr.mxu0 0.0
    %1585 = vmatpush1.msra.mxu0 0.0
    %1586 = vmatprep.subr.mxu0 0.0
    %1587 = vmatpush1.msra.mxu0 0.0
    %1588 = vmatprep.subr.mxu0 0.0
    %1589 = vmatpush1.msra.mxu0 0.0
    %1590 = vmatprep.subr.mxu0 0.0
    %1591 = vmatpush1.msra.mxu0 0.0
    %1592 = vmatprep.subr.mxu0 0.0
    %1593 = vmatpush1.msra.mxu0 0.0
    %1594 = vmatprep.subr.mxu0 0.0
    %1595 = vmatpush1.msra.mxu0 0.0
    %1596 = vmatprep.subr.mxu0 0.0
    %1597 = vmatpush1.msra.mxu0 0.0
    %1598 = vmatprep.mubr.f32.mxu0 0.0
    %1599 = vmatmul.mubr.f32.gmra.mrb[0].mxu0 %v1532
    %v1600 = vpop.f32.mrb[0].mxu0
    %v1601 = vadd.f32 %v469, %v1600
    %v1602 = vpop.f32.mrb[0].mxu0
    %v1603 = vadd.f32 %v473, %v1602
    %1604 = vdwg.mxu0
    %1605 = vmatprep.subr.mxu0 0.0
    %1606 = vmatpush1.msra.mxu0 %v417
    %1607 = vmatprep.subr.mxu0 0.0
    %1608 = vmatpush1.msra.mxu0 %v420
    %1609 = vmatprep.subr.mxu0 0.0
    %1610 = vmatpush1.msra.mxu0 %v423
    %1611 = vmatprep.subr.mxu0 0.0
    %1612 = vmatpush1.msra.mxu0 %v426
    %1613 = vmatprep.subr.mxu0 0.0
    %1614 = vmatpush1.msra.mxu0 %v429
    %1615 = vmatprep.subr.mxu0 0.0
    %1616 = vmatpush1.msra.mxu0 %v432
    %1617 = vmatprep.subr.mxu0 0.0
    %1618 = vmatpush1.msra.mxu0 %v435
    %1619 = vmatprep.subr.mxu0 0.0
    %1620 = vmatpush1.msra.mxu0 %v438
    %1621 = vmatprep.subr.mxu0 0.0
    %1622 = vmatpush1.msra.mxu0 %v441
    %1623 = vmatprep.subr.mxu0 0.0
    %1624 = vmatpush1.msra.mxu0 %v444
    %1625 = vmatprep.subr.mxu0 0.0
    %1626 = vmatpush1.msra.mxu0 %v447
    %1627 = vmatprep.subr.mxu0 0.0
    %1628 = vmatpush1.msra.mxu0 %v450
    %1629 = vmatprep.subr.mxu0 0.0
    %1630 = vmatpush1.msra.mxu0 %v453
    %1631 = vmatprep.subr.mxu0 0.0
    %1632 = vmatpush1.msra.mxu0 %v456
    %1633 = vmatprep.subr.mxu0 0.0
    %1634 = vmatpush1.msra.mxu0 %v459
    %1635 = vmatprep.subr.mxu0 0.0
    %1636 = vmatpush1.msra.mxu0 %v462
    %1637 = vmatprep.subr.mxu0 0.0
    %1638 = vmatpush1.msra.mxu0 0.0
    %1639 = vmatprep.subr.mxu0 0.0
    %1640 = vmatpush1.msra.mxu0 0.0
    %1641 = vmatprep.subr.mxu0 0.0
    %1642 = vmatpush1.msra.mxu0 0.0
    %1643 = vmatprep.subr.mxu0 0.0
    %1644 = vmatpush1.msra.mxu0 0.0
    %1645 = vmatprep.subr.mxu0 0.0
    %1646 = vmatpush1.msra.mxu0 0.0
    %1647 = vmatprep.subr.mxu0 0.0
    %1648 = vmatpush1.msra.mxu0 0.0
    %1649 = vmatprep.subr.mxu0 0.0
    %1650 = vmatpush1.msra.mxu0 0.0
    %1651 = vmatprep.subr.mxu0 0.0
    %1652 = vmatpush1.msra.mxu0 0.0
    %1653 = vmatprep.subr.mxu0 0.0
    %1654 = vmatpush1.msra.mxu0 0.0
    %1655 = vmatprep.subr.mxu0 0.0
    %1656 = vmatpush1.msra.mxu0 0.0
    %1657 = vmatprep.subr.mxu0 0.0
    %1658 = vmatpush1.msra.mxu0 0.0
    %1659 = vmatprep.subr.mxu0 0.0
    %1660 = vmatpush1.msra.mxu0 0.0
    %1661 = vmatprep.subr.mxu0 0.0
    %1662 = vmatpush1.msra.mxu0 0.0
    %1663 = vmatprep.subr.mxu0 0.0
    %1664 = vmatpush1.msra.mxu0 0.0
    %1665 = vmatprep.subr.mxu0 0.0
    %1666 = vmatpush1.msra.mxu0 0.0
    %1667 = vmatprep.subr.mxu0 0.0
    %1668 = vmatpush1.msra.mxu0 0.0
    %1669 = vmatprep.mubr.f32.mxu0 0.0
    %1670 = vmatmul.mubr.f32.gmra.mrb[0].mxu0 %v1532
    %v1671 = vpop.f32.mrb[0].mxu0
    %v1672 = vadd.f32 %v477, %v1671
    %v1673 = vpop.f32.mrb[0].mxu0
    %1674 = vdwg.mxu0
    %v1676 = vrot.slane %v1601, 4
    %v1678 = vadd.f32 %v336, %v1676
    %v1679 = vxor.u32 %v1678, 2147483648
    %v1680 = vmul.f32 %v1679, 1.442695
    %v1681 = vpow.pop %v1680
    %v1682 = vadd.f32 %v1681, 1.0
    %v1683 = vrcp.pop %v1682
    %v1684 = vmul.f32 1.0, %v1683
    %v1686 = vrot.slane %v1603, 4
    %v1688 = vadd.f32 %v338, %v1686
    %v1689 = vxor.u32 %v1688, 2147483648
    %v1690 = vmul.f32 %v1689, 1.442695
    %v1691 = vpow.pop %v1690
    %v1692 = vadd.f32 %v1691, 1.0
    %v1693 = vrcp.pop %v1692
    %v1694 = vmul.f32 1.0, %v1693
    %v1696 = vrot.slane %v1672, 4
    %v1698 = vmul.f32 %v1684, %v1696
    %v1699 = vadd.f32 %v412, %v1698
    %v1700 = vtanh.pop %v1699
    %v1701 = vsub.f32 1.0, %v1694
    %v1702 = vmul.f32 %v1701, %v1700
    %v1703 = vrot.slane %v1526, 6
    %v1705 = vmul.f32 %v1694, %v1703
    %v1706 = vadd.f32 %v1702, %v1705
    %s1707 = scalar_lea.vmem [#allocation11], 12
    %1708 = vst [vmem:[%s1707 - $0x4] sm:$0x30] %v1706
    %s1709 = scalar_lea.vmem [#allocation10], 14
    %1710 = vst [vmem:[%s1709 - $0x6] sm:$0xc0] %v195
    %v1712 = vrot.slane %v1706, 4
    %1714 = vmatprep.subr.mxu0 %v416
    %1715 = vmatpush1.msra.mxu0 %v415
    %1716 = vmatprep.subr.mxu0 %v419
    %1717 = vmatpush1.msra.mxu0 %v418
    %1718 = vmatprep.subr.mxu0 %v422
    %1719 = vmatpush1.msra.mxu0 %v421
    %1720 = vmatprep.subr.mxu0 %v425
    %1721 = vmatpush1.msra.mxu0 %v424
    %1722 = vmatprep.subr.mxu0 %v428
    %1723 = vmatpush1.msra.mxu0 %v427
    %1724 = vmatprep.subr.mxu0 %v431
    %1725 = vmatpush1.msra.mxu0 %v430
    %1726 = vmatprep.subr.mxu0 %v434
    %1727 = vmatpush1.msra.mxu0 %v433
    %1728 = vmatprep.subr.mxu0 %v437
    %1729 = vmatpush1.msra.mxu0 %v436
    %1730 = vmatprep.subr.mxu0 %v440
    %1731 = vmatpush1.msra.mxu0 %v439
    %1732 = vmatprep.subr.mxu0 %v443
    %1733 = vmatpush1.msra.mxu0 %v442
    %1734 = vmatprep.subr.mxu0 %v446
    %1735 = vmatpush1.msra.mxu0 %v445
    %1736 = vmatprep.subr.mxu0 %v449
    %1737 = vmatpush1.msra.mxu0 %v448
    %1738 = vmatprep.subr.mxu0 %v452
    %1739 = vmatpush1.msra.mxu0 %v451
    %1740 = vmatprep.subr.mxu0 %v455
    %1741 = vmatpush1.msra.mxu0 %v454
    %1742 = vmatprep.subr.mxu0 %v458
    %1743 = vmatpush1.msra.mxu0 %v457
    %1744 = vmatprep.subr.mxu0 %v461
    %1745 = vmatpush1.msra.mxu0 %v460
    %1746 = vmatprep.subr.mxu0 0.0
    %1747 = vmatpush1.msra.mxu0 0.0
    %1748 = vmatprep.subr.mxu0 0.0
    %1749 = vmatpush1.msra.mxu0 0.0
    %1750 = vmatprep.subr.mxu0 0.0
    %1751 = vmatpush1.msra.mxu0 0.0
    %1752 = vmatprep.subr.mxu0 0.0
    %1753 = vmatpush1.msra.mxu0 0.0
    %1754 = vmatprep.subr.mxu0 0.0
    %1755 = vmatpush1.msra.mxu0 0.0
    %1756 = vmatprep.subr.mxu0 0.0
    %1757 = vmatpush1.msra.mxu0 0.0
    %1758 = vmatprep.subr.mxu0 0.0
    %1759 = vmatpush1.msra.mxu0 0.0
    %1760 = vmatprep.subr.mxu0 0.0
    %1761 = vmatpush1.msra.mxu0 0.0
    %1762 = vmatprep.subr.mxu0 0.0
    %1763 = vmatpush1.msra.mxu0 0.0
    %1764 = vmatprep.subr.mxu0 0.0
    %1765 = vmatpush1.msra.mxu0 0.0
    %1766 = vmatprep.subr.mxu0 0.0
    %1767 = vmatpush1.msra.mxu0 0.0
    %1768 = vmatprep.subr.mxu0 0.0
    %1769 = vmatpush1.msra.mxu0 0.0
    %1770 = vmatprep.subr.mxu0 0.0
    %1771 = vmatpush1.msra.mxu0 0.0
    %1772 = vmatprep.subr.mxu0 0.0
    %1773 = vmatpush1.msra.mxu0 0.0
    %1774 = vmatprep.subr.mxu0 0.0
    %1775 = vmatpush1.msra.mxu0 0.0
    %1776 = vmatprep.subr.mxu0 0.0
    %1777 = vmatpush1.msra.mxu0 0.0
    %1778 = vmatprep.mubr.f32.mxu0 0.0
    %1779 = vmatmul.mubr.f32.gmra.mrb[0].mxu0 %v1712
    %v1780 = vpop.f32.mrb[0].mxu0
    %v1781 = vadd.f32 %v469, %v1780
    %v1782 = vpop.f32.mrb[0].mxu0
    %v1783 = vadd.f32 %v473, %v1782
    %1784 = vdwg.mxu0
    %1785 = vmatprep.subr.mxu0 0.0
    %1786 = vmatpush1.msra.mxu0 %v417
    %1787 = vmatprep.subr.mxu0 0.0
    %1788 = vmatpush1.msra.mxu0 %v420
    %1789 = vmatprep.subr.mxu0 0.0
    %1790 = vmatpush1.msra.mxu0 %v423
    %1791 = vmatprep.subr.mxu0 0.0
    %1792 = vmatpush1.msra.mxu0 %v426
    %1793 = vmatprep.subr.mxu0 0.0
    %1794 = vmatpush1.msra.mxu0 %v429
    %1795 = vmatprep.subr.mxu0 0.0
    %1796 = vmatpush1.msra.mxu0 %v432
    %1797 = vmatprep.subr.mxu0 0.0
    %1798 = vmatpush1.msra.mxu0 %v435
    %1799 = vmatprep.subr.mxu0 0.0
    %1800 = vmatpush1.msra.mxu0 %v438
    %1801 = vmatprep.subr.mxu0 0.0
    %1802 = vmatpush1.msra.mxu0 %v441
    %1803 = vmatprep.subr.mxu0 0.0
    %1804 = vmatpush1.msra.mxu0 %v444
    %1805 = vmatprep.subr.mxu0 0.0
    %1806 = vmatpush1.msra.mxu0 %v447
    %1807 = vmatprep.subr.mxu0 0.0
    %1808 = vmatpush1.msra.mxu0 %v450
    %1809 = vmatprep.subr.mxu0 0.0
    %1810 = vmatpush1.msra.mxu0 %v453
    %1811 = vmatprep.subr.mxu0 0.0
    %1812 = vmatpush1.msra.mxu0 %v456
    %1813 = vmatprep.subr.mxu0 0.0
    %1814 = vmatpush1.msra.mxu0 %v459
    %1815 = vmatprep.subr.mxu0 0.0
    %1816 = vmatpush1.msra.mxu0 %v462
    %1817 = vmatprep.subr.mxu0 0.0
    %1818 = vmatpush1.msra.mxu0 0.0
    %1819 = vmatprep.subr.mxu0 0.0
    %1820 = vmatpush1.msra.mxu0 0.0
    %1821 = vmatprep.subr.mxu0 0.0
    %1822 = vmatpush1.msra.mxu0 0.0
    %1823 = vmatprep.subr.mxu0 0.0
    %1824 = vmatpush1.msra.mxu0 0.0
    %1825 = vmatprep.subr.mxu0 0.0
    %1826 = vmatpush1.msra.mxu0 0.0
    %1827 = vmatprep.subr.mxu0 0.0
    %1828 = vmatpush1.msra.mxu0 0.0
    %1829 = vmatprep.subr.mxu0 0.0
    %1830 = vmatpush1.msra.mxu0 0.0
    %1831 = vmatprep.subr.mxu0 0.0
    %1832 = vmatpush1.msra.mxu0 0.0
    %1833 = vmatprep.subr.mxu0 0.0
    %1834 = vmatpush1.msra.mxu0 0.0
    %1835 = vmatprep.subr.mxu0 0.0
    %1836 = vmatpush1.msra.mxu0 0.0
    %1837 = vmatprep.subr.mxu0 0.0
    %1838 = vmatpush1.msra.mxu0 0.0
    %1839 = vmatprep.subr.mxu0 0.0
    %1840 = vmatpush1.msra.mxu0 0.0
    %1841 = vmatprep.subr.mxu0 0.0
    %1842 = vmatpush1.msra.mxu0 0.0
    %1843 = vmatprep.subr.mxu0 0.0
    %1844 = vmatpush1.msra.mxu0 0.0
    %1845 = vmatprep.subr.mxu0 0.0
    %1846 = vmatpush1.msra.mxu0 0.0
    %1847 = vmatprep.subr.mxu0 0.0
    %1848 = vmatpush1.msra.mxu0 0.0
    %1849 = vmatprep.mubr.f32.mxu0 0.0
    %1850 = vmatmul.mubr.f32.gmra.mrb[0].mxu0 %v1712
    %v1851 = vpop.f32.mrb[0].mxu0
    %v1852 = vadd.f32 %v477, %v1851
    %v1853 = vpop.f32.mrb[0].mxu0
    %1854 = vdwg.mxu0
    %v1856 = vrot.slane %v1781, 2
    %v1858 = vadd.f32 %v336, %v1856
    %v1859 = vxor.u32 %v1858, 2147483648
    %v1860 = vmul.f32 %v1859, 1.442695
    %v1861 = vpow.pop %v1860
    %v1862 = vadd.f32 %v1861, 1.0
    %v1863 = vrcp.pop %v1862
    %v1864 = vmul.f32 1.0, %v1863
    %v1866 = vrot.slane %v1783, 2
    %v1868 = vadd.f32 %v338, %v1866
    %v1869 = vxor.u32 %v1868, 2147483648
    %v1870 = vmul.f32 %v1869, 1.442695
    %v1871 = vpow.pop %v1870
    %v1872 = vadd.f32 %v1871, 1.0
    %v1873 = vrcp.pop %v1872
    %v1874 = vmul.f32 1.0, %v1873
    %v1876 = vrot.slane %v1852, 2
    %v1878 = vmul.f32 %v1864, %v1876
    %v1879 = vadd.f32 %v412, %v1878
    %v1880 = vtanh.pop %v1879
    %v1881 = vsub.f32 1.0, %v1874
    %v1882 = vmul.f32 %v1881, %v1880
    %v1883 = vrot.slane %v1706, 6
    %v1885 = vmul.f32 %v1874, %v1883
    %v1886 = vadd.f32 %v1882, %v1885
    %s1887 = scalar_lea.vmem [#allocation11], 14
    %1888 = vst [vmem:[%s1887 - $0x6] sm:$0xc0] %v1886
    %1889 = vst [vmem:[#allocation13 - $0x6] sm:$0xc0] %v1886
    %v1890 = vld [vmem:[#allocation8] sm:$0xff]
    %v1891 = vld [vmem:[#allocation8 + $0x8] sm:$0xff]
    %v1892 = vld [vmem:[#allocation8 + $0x10] sm:$0xff]
    %v1893 = vld [vmem:[#allocation8 + $0x18] sm:$0xff]
    %v1894 = vld [vmem:[#allocation8 + $0x20] sm:$0xff]
    %v1895 = vld [vmem:[#allocation8 + $0x28] sm:$0xff]
    %v1896 = vld [vmem:[#allocation8 + $0x30] sm:$0xff]
    %v1897 = vld [vmem:[#allocation8 + $0x38] sm:$0xff]
    %v1898 = vld [vmem:[#allocation8 + $0x40] sm:$0xff]
    %v1899 = vld [vmem:[#allocation8 + $0x48] sm:$0xff]
    %v1900 = vld [vmem:[#allocation8 + $0x50] sm:$0xff]
    %v1901 = vld [vmem:[#allocation8 + $0x58] sm:$0xff]
    %v1902 = vld [vmem:[#allocation8 + $0x60] sm:$0xff]
    %v1903 = vld [vmem:[#allocation8 + $0x68] sm:$0xff]
    %v1904 = vld [vmem:[#allocation8 + $0x70] sm:$0xff]
    %v1905 = vld [vmem:[#allocation8 + $0x78] sm:$0xff]
    %v1906 = vld [vmem:[#allocation8 + $0x80] sm:$0xff]
    %v1907 = vld [vmem:[#allocation8 + $0x88] sm:$0xff]
    %v1908 = vld [vmem:[#allocation8 + $0x90] sm:$0xff]
    %v1909 = vld [vmem:[#allocation8 + $0x98] sm:$0xff]
    %v1910 = vld [vmem:[#allocation8 + $0xa0] sm:$0xff]
    %v1911 = vld [vmem:[#allocation8 + $0xa8] sm:$0xff]
    %v1912 = vld [vmem:[#allocation8 + $0xb0] sm:$0xff]
    %v1913 = vld [vmem:[#allocation8 + $0xb8] sm:$0xff]
    %v1914 = vld [vmem:[#allocation8 + $0xc0] sm:$0xff]
    %v1915 = vld [vmem:[#allocation8 + $0xc8] sm:$0xff]
    %v1916 = vld [vmem:[#allocation8 + $0xd0] sm:$0xff]
    %v1917 = vld [vmem:[#allocation8 + $0xd8] sm:$0xff]
    %v1918 = vld [vmem:[#allocation8 + $0xe0] sm:$0xff]
    %v1919 = vld [vmem:[#allocation8 + $0xe8] sm:$0xff]
    %v1920 = vld [vmem:[#allocation8 + $0xf0] sm:$0xff]
    %v1921 = vld [vmem:[#allocation8 + $0xf8] sm:$0xff]
    %v1922 = vld [vmem:[%s7] sm:$0x3]
    %v1924 = vlaneseq
    %v1925 = vshrl.u32 %v1924, 7
    %v1926 = vsub.s32 0, %v1925
    %v1927 = vrot.slane %v1922, %v1926
    %v1928 = vlaneseq
    %v1929 = vshrl.u32 %v1928, 7
    %v1930 = vsub.s32 1, %v1929
    %v1931 = vrot.slane %v1922, %v1930
    %v1935 = vrot.slane %v1886, 6
    %1937 = vmatprep.subr.mxu0 %v1891
    %1938 = vmatpush1.msra.mxu0 %v1890
    %1939 = vmatprep.subr.mxu0 %v1893
    %1940 = vmatpush1.msra.mxu0 %v1892
    %1941 = vmatprep.subr.mxu0 %v1895
    %1942 = vmatpush1.msra.mxu0 %v1894
    %1943 = vmatprep.subr.mxu0 %v1897
    %1944 = vmatpush1.msra.mxu0 %v1896
    %1945 = vmatprep.subr.mxu0 %v1899
    %1946 = vmatpush1.msra.mxu0 %v1898
    %1947 = vmatprep.subr.mxu0 %v1901
    %1948 = vmatpush1.msra.mxu0 %v1900
    %1949 = vmatprep.subr.mxu0 %v1903
    %1950 = vmatpush1.msra.mxu0 %v1902
    %1951 = vmatprep.subr.mxu0 %v1905
    %1952 = vmatpush1.msra.mxu0 %v1904
    %1953 = vmatprep.subr.mxu0 %v1907
    %1954 = vmatpush1.msra.mxu0 %v1906
    %1955 = vmatprep.subr.mxu0 %v1909
    %1956 = vmatpush1.msra.mxu0 %v1908
    %1957 = vmatprep.subr.mxu0 %v1911
    %1958 = vmatpush1.msra.mxu0 %v1910
    %1959 = vmatprep.subr.mxu0 %v1913
    %1960 = vmatpush1.msra.mxu0 %v1912
    %1961 = vmatprep.subr.mxu0 %v1915
    %1962 = vmatpush1.msra.mxu0 %v1914
    %1963 = vmatprep.subr.mxu0 %v1917
    %1964 = vmatpush1.msra.mxu0 %v1916
    %1965 = vmatprep.subr.mxu0 %v1919
    %1966 = vmatpush1.msra.mxu0 %v1918
    %1967 = vmatprep.subr.mxu0 %v1921
    %1968 = vmatpush1.msra.mxu0 %v1920
    %1969 = vmatprep.subr.mxu0 0.0
    %1970 = vmatpush1.msra.mxu0 0.0
    %1971 = vmatprep.subr.mxu0 0.0
    %1972 = vmatpush1.msra.mxu0 0.0
    %1973 = vmatprep.subr.mxu0 0.0
    %1974 = vmatpush1.msra.mxu0 0.0
    %1975 = vmatprep.subr.mxu0 0.0
    %1976 = vmatpush1.msra.mxu0 0.0
    %1977 = vmatprep.subr.mxu0 0.0
    %1978 = vmatpush1.msra.mxu0 0.0
    %1979 = vmatprep.subr.mxu0 0.0
    %1980 = vmatpush1.msra.mxu0 0.0
    %1981 = vmatprep.subr.mxu0 0.0
    %1982 = vmatpush1.msra.mxu0 0.0
    %1983 = vmatprep.subr.mxu0 0.0
    %1984 = vmatpush1.msra.mxu0 0.0
    %1985 = vmatprep.subr.mxu0 0.0
    %1986 = vmatpush1.msra.mxu0 0.0
    %1987 = vmatprep.subr.mxu0 0.0
    %1988 = vmatpush1.msra.mxu0 0.0
    %1989 = vmatprep.subr.mxu0 0.0
    %1990 = vmatpush1.msra.mxu0 0.0
    %1991 = vmatprep.subr.mxu0 0.0
    %1992 = vmatpush1.msra.mxu0 0.0
    %1993 = vmatprep.subr.mxu0 0.0
    %1994 = vmatpush1.msra.mxu0 0.0
    %1995 = vmatprep.subr.mxu0 0.0
    %1996 = vmatpush1.msra.mxu0 0.0
    %1997 = vmatprep.subr.mxu0 0.0
    %1998 = vmatpush1.msra.mxu0 0.0
    %1999 = vmatprep.subr.mxu0 0.0
    %2000 = vmatpush1.msra.mxu0 0.0
    %2001 = vmatprep.mubr.f32.mxu0 0.0
    %2002 = vmatmul.mubr.f32.gmra.mrb[0].mxu0 %v1935
    %v2003 = vpop.f32.mrb[0].mxu0
    %v2004 = vadd.f32 %v1927, %v2003
    %v2005 = vpop.f32.mrb[0].mxu0
    %v2006 = vadd.f32 %v1931, %v2005
    %2007 = vdwg.mxu0
    %2008 = vst [vmem:[#allocation14] sm:$0x3] %v2004
    %2009 = vst [vmem:[#allocation16] sm:$0x3] %v2006
    // Predicated region
    $region50: #{tpu_custom_call.1} parent=1 // pred_check
      _
    $region51: #{tpu_custom_call.1} parent=1 // pred_check_branch
      %2011 = sbr.rel (0) target = $region53
    $region52: #{tpu_custom_call.1} parent=1 // pred_region
      %s2013 = ssub.s32 256, 256
      %2014 = vsyncadd [#allocation4], %s2013
      %s2015 = sshll.u32 [#allocation10], 4
      %s2016 = int_to_ptr.vmem [resolvable:$true] %s2015
      %2021 = dma.vmem_to_hbm [thread:$0]  %s2016, 256, %s8, [#allocation4], 32, 32, 2
    $region53: #{tpu_custom_call.1} parent=1 // pred_fallthru
      _
    // Predicated region
    $region54: #{tpu_custom_call.1} parent=1 // pred_check
      _
    $region55: #{tpu_custom_call.1} parent=1 // pred_check_branch
      %2023 = sbr.rel (0) target = $region57
    $region56: #{tpu_custom_call.1} parent=1 // pred_region
      %s2025 = ssub.s32 256, 256
      %2026 = vsyncadd [#allocation12], %s2025
      %s2027 = sshll.u32 [#allocation11], 4
      %s2028 = int_to_ptr.vmem [resolvable:$true] %s2027
      %2033 = dma.vmem_to_hbm [thread:$0]  %s2028, 256, %s9, [#allocation12], 32, 32, 2
    $region57: #{tpu_custom_call.1} parent=1 // pred_fallthru
      _
    // Predicated region
    $region58: #{tpu_custom_call.1} parent=1 // pred_check
      _
    $region59: #{tpu_custom_call.1} parent=1 // pred_check_branch
      %2035 = sbr.rel (0) target = $region61
    $region60: #{tpu_custom_call.1} parent=1 // pred_region
      %s2037 = ssub.s32 32, 32
      %2038 = vsyncadd [#allocation12], %s2037
      %s2040 = sshll.u32 [#allocation13], 4
      %s2041 = int_to_ptr.vmem [resolvable:$true] %s2040
      %2043 = dma.vmem_to_hbm [thread:$0]  %s2041, 32, %s10, [#allocation12]
    $region61: #{tpu_custom_call.1} parent=1 // pred_fallthru
      _
    // Predicated region
    $region62: #{tpu_custom_call.1} parent=1 // pred_check
      _
    $region63: #{tpu_custom_call.1} parent=1 // pred_check_branch
      %2045 = sbr.rel (0) target = $region65
    $region64: #{tpu_custom_call.1} parent=1 // pred_region
      %s2047 = ssub.s32 32, 32
      %2048 = vsyncadd [#allocation15], %s2047
      %s2050 = sshll.u32 [#allocation14], 4
      %s2051 = int_to_ptr.vmem [resolvable:$true] %s2050
      %2053 = dma.vmem_to_hbm [thread:$0]  %s2051, 32, %s11, [#allocation15]
    $region65: #{tpu_custom_call.1} parent=1 // pred_fallthru
      _
    // Predicated region
    $region66: #{tpu_custom_call.1} parent=1 // pred_check
      _
    $region67: #{tpu_custom_call.1} parent=1 // pred_check_branch
      %2055 = sbr.rel (0) target = $region69
    $region68: #{tpu_custom_call.1} parent=1 // pred_region
      %s2057 = ssub.s32 32, 32
      %2058 = vsyncadd [#allocation15], %s2057
      %s2060 = sshll.u32 [#allocation16], 4
      %s2061 = int_to_ptr.vmem [resolvable:$true] %s2060
      %2063 = dma.vmem_to_hbm [thread:$0]  %s2061, 32, %s12, [#allocation15]
    $region69: #{tpu_custom_call.1} parent=1 // pred_fallthru
      _
    // Predicated region
    $region70: #{tpu_custom_call.1} parent=1 // pred_check
      _
    $region71: #{tpu_custom_call.1} parent=1 // pred_check_branch
      %2065 = sbr.rel (0) target = $region73
    $region72: #{tpu_custom_call.1} parent=1 // pred_region
      %2066 = dma.done [#allocation4], 256
    $region73: #{tpu_custom_call.1} parent=1 // pred_fallthru
      _
    // Predicated region
    $region74: #{tpu_custom_call.1} parent=1 // pred_check
      _
    $region75: #{tpu_custom_call.1} parent=1 // pred_check_branch
      %2068 = sbr.rel (0) target = $region77
    $region76: #{tpu_custom_call.1} parent=1 // pred_region
      %2069 = dma.done [#allocation12], 256
    $region77: #{tpu_custom_call.1} parent=1 // pred_fallthru
      _
    // Predicated region
    $region78: #{tpu_custom_call.1} parent=1 // pred_check
      _
    $region79: #{tpu_custom_call.1} parent=1 // pred_check_branch
      %2071 = sbr.rel (0) target = $region81
    $region80: #{tpu_custom_call.1} parent=1 // pred_region
      %2072 = dma.done [#allocation12], 32
    $region81: #{tpu_custom_call.1} parent=1 // pred_fallthru
      _
    // Predicated region
    $region82: #{tpu_custom_call.1} parent=1 // pred_check
      _
    $region83: #{tpu_custom_call.1} parent=1 // pred_check_branch
      %2074 = sbr.rel (0) target = $region85
    $region84: #{tpu_custom_call.1} parent=1 // pred_region
      %2075 = dma.done [#allocation15], 32
    $region85: #{tpu_custom_call.1} parent=1 // pred_fallthru
      _
    // Predicated region
    $region86: #{tpu_custom_call.1} parent=1 // pred_check
      _
    $region87: #{tpu_custom_call.1} parent=1 // pred_check_branch
      %2077 = sbr.rel (0) target = $region89
    $region88: #{tpu_custom_call.1} parent=1 // pred_region
      %2078 = dma.done [#allocation15], 32
    $region89: #{tpu_custom_call.1} parent=1 // pred_fallthru
      _
    %2079 = vsyncpa [#allocation3], 1
    %2080 = vsyncpa [#allocation6], 1
    %2081 = vsyncpa [#allocation9], 1
    %2082 = vsyncpa [#allocation4], 1
    %2083 = vsyncpa [#allocation12], 1
    %2084 = vsyncpa [#allocation15], 1

</llo_original>
